<compile_context>
chip_gen: v6e
topology: v6e:2x2x1
jax: 0.10.0
libtpu: 0.0.40
codegen_flags: <defaults>
</compile_context>

<pallas_src>
import functools

import jax
import jax.numpy as jnp
from jax import lax
from jax.experimental import pallas as pl
from jax.experimental.pallas import tpu as pltpu


# ---------------------------------------------------------------------------
# per-generation budgets
# ---------------------------------------------------------------------------
def _tpu_vmem_bytes():
    try:
        return int(pltpu.get_tpu_info().vmem_capacity_bytes)
    except Exception:
        return 64 * 1024 * 1024           # conservative (v7x-sized) fallback


_VMEM_BYTES = _tpu_vmem_bytes()
# v5e/v6e (128 MiB VMEM): 64 MiB scoped limit, TM cap 2048.
# v7x     (64  MiB VMEM): 32 MiB scoped limit, TM cap 1024.
_VMEM_LIMIT = min(_VMEM_BYTES // 2, 64 * 1024 * 1024)
_TM_CAP = 2048 if _VMEM_BYTES >= 128 * 1024 * 1024 else 1024


def _round_up(x, m):
    return (x + m - 1) // m * m


def _choose_tm(m, cap):
    """Balanced M tile: multiple of 8, <= cap, avoids ~2x padding for unlucky M."""
    m8 = _round_up(m, 8)
    if m8 <= cap:
        return m8
    n_tiles = -(-m8 // cap)
    return _round_up(-(-m8 // n_tiles), 8)


# ---------------------------------------------------------------------------
# Pallas kernels
# ---------------------------------------------------------------------------
def _gemm_stats_kernel(x_ref, w_ref, y_ref, sum_ref, sq_ref):
    """Conv-as-GEMM tile (bf16 operands, fp32 MXU accumulate) + per-tile column stats.

    y is stored as bf16; per-column sum / sum-of-squares are taken from the fp32
    accumulator *before* the cast and written as per-tile partials (the wrapper
    reduces them into the folded BN scale/shift), so the M grid axis is fully
    'parallel'.  The stem conv bias is intentionally absent: it is cancelled
    exactly by train-mode BatchNorm mean subtraction.  Zero-padded M rows
    contribute zero to both partial sums.
    """
    y = jnp.dot(x_ref[...], w_ref[...], preferred_element_type=jnp.float32)
    y_ref[...] = y.astype(y_ref.dtype)
    s = jnp.sum(y, axis=0, keepdims=True)        # (1, N) fp32
    q = jnp.sum(y * y, axis=0, keepdims=True)    # (1, N) fp32
    # Stat blocks are (1, 8, N) so their last two dims stay (8, 128)-tileable.
    sum_ref[...] = jnp.broadcast_to(s[None], sum_ref.shape)
    sq_ref[...] = jnp.broadcast_to(q[None], sq_ref.shape)


def _affine_relu_gemm_bias_kernel(x_ref, s_ref, t_ref, w_ref, b_ref, o_ref):
    """Patch-projection tile.

    Applies the previous layer's folded BatchNorm affine + ReLU to the raw bf16
    input tile in-register (this reorg involves no padding, so the fusion is
    exact), then GEMM + bias.  Eliminates the standalone BN-apply pass.
    """
    x = jnp.maximum(x_ref[...].astype(jnp.float32) * s_ref[...] + t_ref[...], 0.0)
    acc = jnp.dot(x.astype(jnp.bfloat16), w_ref[...],
                  preferred_element_type=jnp.float32)
    o_ref[...] = (acc + b_ref[...]).astype(o_ref.dtype)


# ---------------------------------------------------------------------------
# kernel wrappers
# ---------------------------------------------------------------------------
def conv_gemm_stats(x, w):
    """x:(M,K) bf16 @ w:(K,N) bf16 -> (y:(M,N) bf16, col_sum:(1,N) f32, col_sq:(1,N) f32)."""
    M, K = x.shape
    N = w.shape[1]
    TM = _choose_tm(M, _TM_CAP)
    Mp = _round_up(M, TM)
    if Mp != M:
        x = jnp.pad(x, ((0, Mp - M), (0, 0)))
    nt = Mp // TM

    # NOTE: the weight / stat operands have constant block indices and are only
    # DMA'd once; on VMEM-tight configs they could additionally be single-buffered
    # via pipeline_mode=pl.Buffered(1) (not needed at these sizes).
    y, psum, psq = pl.pallas_call(
        _gemm_stats_kernel,
        out_shape=(jax.ShapeDtypeStruct((Mp, N), jnp.bfloat16),
                   jax.ShapeDtypeStruct((nt, 8, N), jnp.float32),
                   jax.ShapeDtypeStruct((nt, 8, N), jnp.float32)),
        grid=(nt,),
        in_specs=[
            pl.BlockSpec((TM, K), lambda i: (i, 0)),
            pl.BlockSpec((K, N), lambda i: (0, 0)),
        ],
        out_specs=(
            pl.BlockSpec((TM, N), lambda i: (i, 0)),
            pl.BlockSpec((1, 8, N), lambda i: (i, 0, 0)),
            pl.BlockSpec((1, 8, N), lambda i: (i, 0, 0)),
        ),
        compiler_params=pltpu.CompilerParams(
            dimension_semantics=("parallel",),
            vmem_limit_bytes=_VMEM_LIMIT),
    )(x, w)

    col_sum = jnp.sum(psum[:, 0, :], axis=0, keepdims=True)
    col_sq = jnp.sum(psq[:, 0, :], axis=0, keepdims=True)
    return y[:M], col_sum, col_sq


def fold_bn(col_sum, col_sq, m, gamma, beta, eps=1e-5):
    """Fold train-mode BatchNorm into y*scale + shift (tiny wrapper math)."""
    mean = col_sum / m
    var = jnp.maximum(col_sq / m - mean * mean, 0.0)
    scale = gamma * lax.rsqrt(var + eps)
    shift = beta - mean * scale
    return scale, shift


def affine_relu_proj(x, scale_k, shift_k, w, b, *, out_dtype=jnp.bfloat16):
    """relu(x*scale_k + shift_k) @ w + b, M-tiled; K and N=d_model stay unpadded."""
    M, K = x.shape
    N = w.shape[1]
    TM = _choose_tm(M, _TM_CAP)
    Mp = _round_up(M, TM)
    if Mp != M:
        x = jnp.pad(x, ((0, Mp - M), (0, 0)))
    out = pl.pallas_call(
        _affine_relu_gemm_bias_kernel,
        out_shape=jax.ShapeDtypeStruct((Mp, N), out_dtype),
        grid=(Mp // TM,),
        in_specs=[
            pl.BlockSpec((TM, K), lambda i: (i, 0)),
            pl.BlockSpec((1, K), lambda i: (0, 0)),
            pl.BlockSpec((1, K), lambda i: (0, 0)),
            pl.BlockSpec((K, N), lambda i: (0, 0)),
            pl.BlockSpec((1, N), lambda i: (0, 0)),
        ],
        out_specs=pl.BlockSpec((TM, N), lambda i: (i, 0)),
        compiler_params=pltpu.CompilerParams(
            dimension_semantics=("parallel",),
            vmem_limit_bytes=_VMEM_LIMIT),
    )(x, scale_k, shift_k, w, b)
    return out[:M]


# ---------------------------------------------------------------------------
# JAX glue (im2col / reorg) — layout plumbing only; XLA fuses elementwise into it.
# ---------------------------------------------------------------------------
def im2col_3x3_s2_p1(x_nhwc):
    """3x3 / stride-2 / pad-1 im2col; K ordered (C, kh, kw) to match PyTorch's
    weight.reshape(Cout, Cin*kh*kw).  Any elementwise producer of x_nhwc (e.g. the
    folded BN affine + ReLU) is fused by XLA into this gather, so no separate
    activation array is materialized."""
    B, H, W, C = x_nhwc.shape
    Ho, Wo = (H + 2 - 3) // 2 + 1, (W + 2 - 3) // 2 + 1
    xp = jnp.pad(x_nhwc, ((0, 0), (1, 1), (1, 1), (0, 0)))
    cols = []
    for kh in range(3):
        for kw in range(3):
            cols.append(xp[:, kh: kh + 2 * (Ho - 1) + 1: 2,
                           kw: kw + 2 * (Wo - 1) + 1: 2, :])
    patches = jnp.stack(cols, axis=3)                      # (B,Ho,Wo,9,C)
    patches = patches.reshape(B, Ho, Wo, 3, 3, C)
    patches = jnp.transpose(patches, (0, 1, 2, 5, 3, 4))   # (B,Ho,Wo,C,3,3)
    return patches.reshape(B * Ho * Wo, C * 9), Ho, Wo


def multi_scale_patch_embedding(x_nchw, params, *, patch_sizes, d_model, eps=1e-5):
    """Forward pass; all scales' stems are fused (they share the same input image)."""
    x = jnp.transpose(x_nchw, (0, 2, 3, 1)).astype(jnp.bfloat16)   # NHWC bf16
    B = x.shape[0]

    # ---- stem layer 1: one shared im2col (K = C*9 = 36, unpadded), per-scale
    # weights concatenated along N (lane-dense N = n_scales*64). ----------------
    p1, H1, W1 = im2col_3x3_s2_p1(x)
    y1, s1, q1 = conv_gemm_stats(p1, params["w1"])
    scale1, shift1 = fold_bn(s1, q1, p1.shape[0], params["g1"], params["b1"], eps=eps)

    # Layer-1 BN affine + ReLU must be applied *before* the next conv's zero
    # padding, so it is fused (by XLA) into the im2col gather below instead of
    # into the consumer GEMM kernel.  No standalone activation pass remains.
    a1 = jnp.maximum(y1.astype(jnp.float32) * scale1 + shift1, 0.0).astype(jnp.bfloat16)
    a1 = a1.reshape(B, H1, W1, -1)

    # ---- stem layer 2: shared im2col of the channel-concatenated activation,
    # block-diagonal fused weight (lane-dense N = n_scales*d_model). ------------
    p2, H2, W2 = im2col_3x3_s2_p1(a1)
    y2, s2, q2 = conv_gemm_stats(p2, params["w2"])
    scale2, shift2 = fold_bn(s2, q2, p2.shape[0], params["g2"], params["b2"], eps=eps)
    y2 = y2.reshape(B, H2, W2, -1)                 # raw (pre-BN) bf16

    # ---- per-scale patch projection; layer-2 BN affine + ReLU is folded into the
    # projection kernel itself (the ps x ps reorg has no padding, so it is exact).
    tokens = []
    for s, ps in enumerate(patch_sizes):
        ys = y2[..., s * d_model:(s + 1) * d_model]
        Gh, Gw = H2 // ps, W2 // ps
        xp = ys.reshape(B, Gh, ps, Gw, ps, d_model)
        xp = jnp.transpose(xp, (0, 1, 3, 5, 2, 4))          # (B,Gh,Gw,D,ps,ps)
        xp = xp.reshape(B * Gh * Gw, d_model * ps * ps)
        sk = jnp.repeat(scale2[:, s * d_model:(s + 1) * d_model], ps * ps, axis=1)
        tk = jnp.repeat(shift2[:, s * d_model:(s + 1) * d_model], ps * ps, axis=1)
        tok = affine_relu_proj(xp, sk, tk, params["pw"][s], params["pb"][s])
        tokens.append(tok.reshape(B, Gh * Gw, d_model))
    return jnp.concatenate(tokens, axis=1)                  # (B, n_patches, d_model)


# ---------------------------------------------------------------------------
# Parameter init (shapes from the PyTorch module __init__) + pure-JAX reference.
# ---------------------------------------------------------------------------
def _conv_w_to_gemm(w):
    # PyTorch (Cout, Cin, kh, kw) -> (Cin*kh*kw, Cout), rows ordered (Cin, kh, kw)
    return jnp.transpose(w, (1, 2, 3, 0)).reshape(-1, w.shape[0])


def _fuse_block_diag_conv_w(w_list):
    # Fused layer-2 GEMM weight for the channel-concatenated activation:
    # block-diagonal over (scale_in, scale_out); rows ordered (C_total, kh, kw).
    n = len(w_list)
    cout, cin, kh, kw = w_list[0].shape
    W = jnp.zeros((n * cin, kh, kw, n * cout), w_list[0].dtype)
    for s, w in enumerate(w_list):
        wg = jnp.transpose(w, (1, 2, 3, 0))                  # (Cin, kh, kw, Cout)
        W = W.at[s * cin:(s + 1) * cin, :, :, s * cout:(s + 1) * cout].set(wg)
    return W.reshape(n * cin * kh * kw, n * cout)


def init_params(key, d_model, n_channels, patch_sizes, hidden=64):
    raw = dict(w1=[], w2=[], g1=[], b1=[], g2=[], b2=[], pw=[], pb=[])
    for ps in patch_sizes:
        key, k1, k2, k3, k4, k5, k6, k7, k8 = jax.random.split(key, 9)
        raw["w1"].append(jax.random.normal(k1, (hidden, n_channels, 3, 3), jnp.float32) * 0.1)
        raw["w2"].append(jax.random.normal(k2, (d_model, hidden, 3, 3), jnp.float32) * 0.1)
        raw["pw"].append(jax.random.normal(k3, (d_model, d_model, ps, ps), jnp.float32) * 0.1)
        raw["pb"].append(jax.random.normal(k4, (d_model,), jnp.float32) * 0.01)
        raw["g1"].append(1.0 + 0.1 * jax.random.normal(k5, (hidden,), jnp.float32))
        raw["b1"].append(0.1 * jax.random.normal(k6, (hidden,), jnp.float32))
        raw["g2"].append(1.0 + 0.1 * jax.random.normal(k7, (d_model,), jnp.float32))
        raw["b2"].append(0.1 * jax.random.normal(k8, (d_model,), jnp.float32))

    # NOTE: stem Conv2d biases are omitted on purpose — a per-channel bias added
    # before training-mode BatchNorm is cancelled exactly by the mean subtraction,
    # so the forward output is unchanged without it.
    bf = jnp.bfloat16
    params = dict(
        w1=jnp.concatenate([_conv_w_to_gemm(w) for w in raw["w1"]], axis=1).astype(bf),
        g1=jnp.concatenate(raw["g1"]).reshape(1, -1),
        b1=jnp.concatenate(raw["b1"]).reshape(1, -1),
        w2=_fuse_block_diag_conv_w(raw["w2"]).astype(bf),
        g2=jnp.concatenate(raw["g2"]).reshape(1, -1),
        b2=jnp.concatenate(raw["b2"]).reshape(1, -1),
        pw=[_conv_w_to_gemm(w).astype(bf) for w in raw["pw"]],
        pb=[b.reshape(1, -1) for b in raw["pb"]],
    )
    return params, raw


def reference_forward(x_nchw, raw, patch_sizes, eps=1e-5):
    """Pure-JAX fp32 reference matching the PyTorch module (train-mode BatchNorm)."""
    def conv(x, w, stride, pad):
        return lax.conv_general_dilated(
            x, w, (stride, stride), [(pad, pad), (pad, pad)],
            dimension_numbers=("NCHW", "OIHW", "NCHW"))

    def bn_relu(y, g, b):
        mean = jnp.mean(y, axis=(0, 2, 3), keepdims=True)
        var = jnp.mean((y - mean) ** 2, axis=(0, 2, 3), keepdims=True)   # biased
        yhat = (y - mean) * lax.rsqrt(var + eps)
        return jax.nn.relu(yhat * g[None, :, None, None] + b[None, :, None, None])

    x = x_nchw.astype(jnp.float32)
    tokens = []
    for s, ps in enumerate(patch_sizes):
        a1 = bn_relu(conv(x, raw["w1"][s], 2, 1), raw["g1"][s], raw["b1"][s])
        a2 = bn_relu(conv(a1, raw["w2"][s], 2, 1), raw["g2"][s], raw["b2"][s])
        p = conv(a2, raw["pw"][s], ps, 0) + raw["pb"][s][None, :, None, None]
        B, D, Gh, Gw = p.shape
        tokens.append(jnp.transpose(p.reshape(B, D, Gh * Gw), (0, 2, 1)))
    return jnp.concatenate(tokens, axis=1)


# ---------------------------------------------------------------------------
if __name__ == "__main__":
    # Small config consistent with the module: d_model=64, 16x16 image, 4 channels,
    # two scales (patch sizes 1 and 2).  The stem reduces spatial by 4x -> 4x4 grid,
    # so n_patches = 4*4 + 2*2 = 20.
    batch, n_channels, d_model = 2, 4, 64
    img_size = (16, 16)
    patch_sizes = [1, 2]

    key = jax.random.PRNGKey(0)
    kx, kp = jax.random.split(key)
    x = jax.random.normal(kx, (batch, n_channels, *img_size), jnp.float32)   # NCHW

    params, raw = init_params(kp, d_model, n_channels, patch_sizes)

    fwd = jax.jit(functools.partial(multi_scale_patch_embedding,
                                    patch_sizes=patch_sizes, d_model=d_model))
    out = jax.block_until_ready(fwd(x, params))

    n_patches = sum((img_size[0] // 4 // ps) * (img_size[1] // 4 // ps)
                    for ps in patch_sizes)
    assert out.shape == (batch, n_patches, d_model), out.shape
    assert bool(jnp.all(jnp.isfinite(out)))

    # Loose structural check vs. a pure-JAX fp32 reference (kernel GEMMs run bf16;
    # expected noise is ~1e-2, threshold is 10% of the reference max magnitude).
    ref = reference_forward(x, raw, patch_sizes)
    err = float(jnp.max(jnp.abs(out.astype(jnp.float32) - ref)))
    tol = 0.1 * (float(jnp.max(jnp.abs(ref))) + 1e-6)
    assert err <= tol, (err, tol)

    print("KERNEL_OK")
</pallas_src>

<mosaic_0001>
module attributes {stable_mosaic.version = 11 : i64} {
  func.func @_gemm_stats_kernel(%arg0: i32, %arg1: memref<128x36xbf16, #tpu.memory_space<vmem>>, %arg2: memref<36x128xbf16, #tpu.memory_space<vmem>>, %arg3: memref<128x128xbf16, #tpu.memory_space<vmem>>, %arg4: memref<1x8x128xf32, #tpu.memory_space<vmem>>, %arg5: memref<1x8x128xf32, #tpu.memory_space<vmem>>) attributes {dimension_semantics = [#tpu.dimension_semantics<parallel>], iteration_bounds = array<i64: 1>, scalar_prefetch = 0 : i64, scratch_operands = 0 : i64, tpu.core_type = #tpu.core_type<tc>, window_params = [{transform_indices = @transform_0, window_bounds = array<i64: 128, 36>}, {pipeline_mode = #tpu.pipeline_mode<synchronous>, transform_indices = @transform_1, window_bounds = array<i64: 36, 128>}, {transform_indices = @transform_2, window_bounds = array<i64: 128, 128>}, {transform_indices = @transform_3, window_bounds = array<i64: 1, 8, 128>}, {transform_indices = @transform_4, window_bounds = array<i64: 1, 8, 128>}]} {
    %c0 = arith.constant 0 : index
    %c0_0 = arith.constant 0 : index
    %0 = vector.load %arg1[%c0, %c0_0] : memref<128x36xbf16, #tpu.memory_space<vmem>>, vector<128x36xbf16>
    %c0_1 = arith.constant 0 : index
    %c0_2 = arith.constant 0 : index
    %1 = vector.load %arg2[%c0_1, %c0_2] : memref<36x128xbf16, #tpu.memory_space<vmem>>, vector<36x128xbf16>
    %cst = arith.constant dense<0.000000e+00> : vector<128x128xf32>
    %2 = tpu.matmul %0, %1, %cst {dimension_numbers = #tpu.dot_dimension_numbers<[1], [0], [0], [1], [0, 0, 1, 1], [], []>} : vector<128x36xbf16>, vector<36x128xbf16>, vector<128x128xf32> -> vector<128x128xf32>
    %3 = arith.truncf %2 : vector<128x128xf32> to vector<128x128xbf16>
    %c0_3 = arith.constant 0 : index
    %c0_4 = arith.constant 0 : index
    %4 = vector.load %arg3[%c0_3, %c0_4] : memref<128x128xbf16, #tpu.memory_space<vmem>>, vector<128x128xbf16>
    tpu.vector_store %arg3[%c0_3, %c0_4], %3 {strides = array<i32>} : memref<128x128xbf16, #tpu.memory_space<vmem>>, vector<128x128xbf16>,
    %cst_5 = arith.constant dense<0.000000e+00> : vector<128xf32>
    %5 = vector.multi_reduction <add>, %2, %cst_5 [0] : vector<128x128xf32> to vector<128xf32>
    %6 = vector.shape_cast %5 : vector<128xf32> to vector<1x128xf32>
    %7 = arith.mulf %2, %2 : vector<128x128xf32>
    %cst_6 = arith.constant dense<0.000000e+00> : vector<128xf32>
    %8 = vector.multi_reduction <add>, %7, %cst_6 [0] : vector<128x128xf32> to vector<128xf32>
    %9 = vector.shape_cast %8 : vector<128xf32> to vector<1x128xf32>
    %10 = vector.shape_cast %6 : vector<1x128xf32> to vector<1x1x128xf32>
    %11 = vector.shape_cast %10 : vector<1x1x128xf32> to vector<1x1x128xf32>
    %12 = vector.broadcast %11 : vector<1x1x128xf32> to vector<1x8x128xf32>
    %c0_7 = arith.constant 0 : index
    %c0_8 = arith.constant 0 : index
    %c0_9 = arith.constant 0 : index
    %13 = vector.load %arg4[%c0_7, %c0_8, %c0_9] : memref<1x8x128xf32, #tpu.memory_space<vmem>>, vector<1x8x128xf32>
    tpu.vector_store %arg4[%c0_7, %c0_8, %c0_9], %12 {strides = array<i32>} : memref<1x8x128xf32, #tpu.memory_space<vmem>>, vector<1x8x128xf32>,
    %14 = vector.shape_cast %9 : vector<1x128xf32> to vector<1x1x128xf32>
    %15 = vector.shape_cast %14 : vector<1x1x128xf32> to vector<1x1x128xf32>
    %16 = vector.broadcast %15 : vector<1x1x128xf32> to vector<1x8x128xf32>
    %c0_10 = arith.constant 0 : index
    %c0_11 = arith.constant 0 : index
    %c0_12 = arith.constant 0 : index
    %17 = vector.load %arg5[%c0_10, %c0_11, %c0_12] : memref<1x8x128xf32, #tpu.memory_space<vmem>>, vector<1x8x128xf32>
    tpu.vector_store %arg5[%c0_10, %c0_11, %c0_12], %16 {strides = array<i32>} : memref<1x8x128xf32, #tpu.memory_space<vmem>>, vector<1x8x128xf32>,
    return
  }
  func.func @transform_0(%arg0: i32) -> (i32, i32) {
    %c0_i32 = arith.constant 0 : i32
    %c0_i32_0 = arith.constant 0 : i32
    return %arg0, %c0_i32 : i32, i32
  }
  func.func @transform_1(%arg0: i32) -> (i32, i32) {
    %c0_i32 = arith.constant 0 : i32
    %c0_i32_0 = arith.constant 0 : i32
    %c0_i32_1 = arith.constant 0 : i32
    return %c0_i32, %c0_i32_0 : i32, i32
  }
  func.func @transform_2(%arg0: i32) -> (i32, i32) {
    %c0_i32 = arith.constant 0 : i32
    %c0_i32_0 = arith.constant 0 : i32
    return %arg0, %c0_i32 : i32, i32
  }
  func.func @transform_3(%arg0: i32) -> (i32, i32, i32) {
    %c0_i32 = arith.constant 0 : i32
    %c0_i32_0 = arith.constant 0 : i32
    %c0_i32_1 = arith.constant 0 : i32
    return %arg0, %c0_i32, %c0_i32_0 : i32, i32, i32
  }
  func.func @transform_4(%arg0: i32) -> (i32, i32, i32) {
    %c0_i32 = arith.constant 0 : i32
    %c0_i32_0 = arith.constant 0 : i32
    %c0_i32_1 = arith.constant 0 : i32
    return %arg0, %c0_i32, %c0_i32_0 : i32, i32, i32
  }
}

module attributes {stable_mosaic.version = 11 : i64} {
  func.func @_gemm_stats_kernel(%arg0: i32, %arg1: memref<32x1152xbf16, #tpu.memory_space<vmem>>, %arg2: memref<1152x128xbf16, #tpu.memory_space<vmem>>, %arg3: memref<32x128xbf16, #tpu.memory_space<vmem>>, %arg4: memref<1x8x128xf32, #tpu.memory_space<vmem>>, %arg5: memref<1x8x128xf32, #tpu.memory_space<vmem>>) attributes {dimension_semantics = [#tpu.dimension_semantics<parallel>], iteration_bounds = array<i64: 1>, scalar_prefetch = 0 : i64, scratch_operands = 0 : i64, tpu.core_type = #tpu.core_type<tc>, window_params = [{transform_indices = @transform_0, window_bounds = array<i64: 32, 1152>}, {pipeline_mode = #tpu.pipeline_mode<synchronous>, transform_indices = @transform_1, window_bounds = array<i64: 1152, 128>}, {transform_indices = @transform_2, window_bounds = array<i64: 32, 128>}, {transform_indices = @transform_3, window_bounds = array<i64: 1, 8, 128>}, {transform_indices = @transform_4, window_bounds = array<i64: 1, 8, 128>}]} {
    %c0 = arith.constant 0 : index
    %c0_0 = arith.constant 0 : index
    %0 = vector.load %arg1[%c0, %c0_0] : memref<32x1152xbf16, #tpu.memory_space<vmem>>, vector<32x1152xbf16>
    %c0_1 = arith.constant 0 : index
    %c0_2 = arith.constant 0 : index
    %1 = vector.load %arg2[%c0_1, %c0_2] : memref<1152x128xbf16, #tpu.memory_space<vmem>>, vector<1152x128xbf16>
    %cst = arith.constant dense<0.000000e+00> : vector<32x128xf32>
    %2 = tpu.matmul %0, %1, %cst {dimension_numbers = #tpu.dot_dimension_numbers<[1], [0], [0], [1], [0, 0, 1, 1], [], []>} : vector<32x1152xbf16>, vector<1152x128xbf16>, vector<32x128xf32> -> vector<32x128xf32>
    %3 = arith.truncf %2 : vector<32x128xf32> to vector<32x128xbf16>
    %c0_3 = arith.constant 0 : index
    %c0_4 = arith.constant 0 : index
    %4 = vector.load %arg3[%c0_3, %c0_4] : memref<32x128xbf16, #tpu.memory_space<vmem>>, vector<32x128xbf16>
    tpu.vector_store %arg3[%c0_3, %c0_4], %3 {strides = array<i32>} : memref<32x128xbf16, #tpu.memory_space<vmem>>, vector<32x128xbf16>,
    %cst_5 = arith.constant dense<0.000000e+00> : vector<128xf32>
    %5 = vector.multi_reduction <add>, %2, %cst_5 [0] : vector<32x128xf32> to vector<128xf32>
    %6 = vector.shape_cast %5 : vector<128xf32> to vector<1x128xf32>
    %7 = arith.mulf %2, %2 : vector<32x128xf32>
    %cst_6 = arith.constant dense<0.000000e+00> : vector<128xf32>
    %8 = vector.multi_reduction <add>, %7, %cst_6 [0] : vector<32x128xf32> to vector<128xf32>
    %9 = vector.shape_cast %8 : vector<128xf32> to vector<1x128xf32>
    %10 = vector.shape_cast %6 : vector<1x128xf32> to vector<1x1x128xf32>
    %11 = vector.shape_cast %10 : vector<1x1x128xf32> to vector<1x1x128xf32>
    %12 = vector.broadcast %11 : vector<1x1x128xf32> to vector<1x8x128xf32>
    %c0_7 = arith.constant 0 : index
    %c0_8 = arith.constant 0 : index
    %c0_9 = arith.constant 0 : index
    %13 = vector.load %arg4[%c0_7, %c0_8, %c0_9] : memref<1x8x128xf32, #tpu.memory_space<vmem>>, vector<1x8x128xf32>
    tpu.vector_store %arg4[%c0_7, %c0_8, %c0_9], %12 {strides = array<i32>} : memref<1x8x128xf32, #tpu.memory_space<vmem>>, vector<1x8x128xf32>,
    %14 = vector.shape_cast %9 : vector<1x128xf32> to vector<1x1x128xf32>
    %15 = vector.shape_cast %14 : vector<1x1x128xf32> to vector<1x1x128xf32>
    %16 = vector.broadcast %15 : vector<1x1x128xf32> to vector<1x8x128xf32>
    %c0_10 = arith.constant 0 : index
    %c0_11 = arith.constant 0 : index
    %c0_12 = arith.constant 0 : index
    %17 = vector.load %arg5[%c0_10, %c0_11, %c0_12] : memref<1x8x128xf32, #tpu.memory_space<vmem>>, vector<1x8x128xf32>
    tpu.vector_store %arg5[%c0_10, %c0_11, %c0_12], %16 {strides = array<i32>} : memref<1x8x128xf32, #tpu.memory_space<vmem>>, vector<1x8x128xf32>,
    return
  }
  func.func @transform_0(%arg0: i32) -> (i32, i32) {
    %c0_i32 = arith.constant 0 : i32
    %c0_i32_0 = arith.constant 0 : i32
    return %arg0, %c0_i32 : i32, i32
  }
  func.func @transform_1(%arg0: i32) -> (i32, i32) {
    %c0_i32 = arith.constant 0 : i32
    %c0_i32_0 = arith.constant 0 : i32
    %c0_i32_1 = arith.constant 0 : i32
    return %c0_i32, %c0_i32_0 : i32, i32
  }
  func.func @transform_2(%arg0: i32) -> (i32, i32) {
    %c0_i32 = arith.constant 0 : i32
    %c0_i32_0 = arith.constant 0 : i32
    return %arg0, %c0_i32 : i32, i32
  }
  func.func @transform_3(%arg0: i32) -> (i32, i32, i32) {
    %c0_i32 = arith.constant 0 : i32
    %c0_i32_0 = arith.constant 0 : i32
    %c0_i32_1 = arith.constant 0 : i32
    return %arg0, %c0_i32, %c0_i32_0 : i32, i32, i32
  }
  func.func @transform_4(%arg0: i32) -> (i32, i32, i32) {
    %c0_i32 = arith.constant 0 : i32
    %c0_i32_0 = arith.constant 0 : i32
    %c0_i32_1 = arith.constant 0 : i32
    return %arg0, %c0_i32, %c0_i32_0 : i32, i32, i32
  }
}

module attributes {stable_mosaic.version = 11 : i64} {
  func.func @_affine_relu_gemm_bias_kernel(%arg0: i32, %arg1: memref<32x64xbf16, #tpu.memory_space<vmem>>, %arg2: memref<1x64xf32, #tpu.memory_space<vmem>>, %arg3: memref<1x64xf32, #tpu.memory_space<vmem>>, %arg4: memref<64x64xbf16, #tpu.memory_space<vmem>>, %arg5: memref<1x64xf32, #tpu.memory_space<vmem>>, %arg6: memref<32x64xbf16, #tpu.memory_space<vmem>>) attributes {dimension_semantics = [#tpu.dimension_semantics<parallel>], iteration_bounds = array<i64: 1>, scalar_prefetch = 0 : i64, scratch_operands = 0 : i64, tpu.core_type = #tpu.core_type<tc>, window_params = [{transform_indices = @transform_0, window_bounds = array<i64: 32, 64>}, {pipeline_mode = #tpu.pipeline_mode<synchronous>, transform_indices = @transform_1, window_bounds = array<i64: 1, 64>}, {pipeline_mode = #tpu.pipeline_mode<synchronous>, transform_indices = @transform_2, window_bounds = array<i64: 1, 64>}, {pipeline_mode = #tpu.pipeline_mode<synchronous>, transform_indices = @transform_3, window_bounds = array<i64: 64, 64>}, {pipeline_mode = #tpu.pipeline_mode<synchronous>, transform_indices = @transform_4, window_bounds = array<i64: 1, 64>}, {transform_indices = @transform_5, window_bounds = array<i64: 32, 64>}]} {
    %c0 = arith.constant 0 : index
    %c0_0 = arith.constant 0 : index
    %0 = vector.load %arg1[%c0, %c0_0] : memref<32x64xbf16, #tpu.memory_space<vmem>>, vector<32x64xbf16>
    %1 = arith.extf %0 : vector<32x64xbf16> to vector<32x64xf32>
    %c0_1 = arith.constant 0 : index
    %c0_2 = arith.constant 0 : index
    %2 = vector.load %arg2[%c0_1, %c0_2] : memref<1x64xf32, #tpu.memory_space<vmem>>, vector<1x64xf32>
    %3 = vector.broadcast %2 : vector<1x64xf32> to vector<32x64xf32>
    %4 = arith.mulf %1, %3 : vector<32x64xf32>
    %c0_3 = arith.constant 0 : index
    %c0_4 = arith.constant 0 : index
    %5 = vector.load %arg3[%c0_3, %c0_4] : memref<1x64xf32, #tpu.memory_space<vmem>>, vector<1x64xf32>
    %6 = vector.broadcast %5 : vector<1x64xf32> to vector<32x64xf32>
    %7 = arith.addf %4, %6 : vector<32x64xf32>
    %cst = arith.constant 0.000000e+00 : f32
    %8 = vector.broadcast %cst : f32 to vector<32x64xf32>
    %9 = arith.maximumf %7, %8 : vector<32x64xf32>
    %10 = arith.truncf %9 : vector<32x64xf32> to vector<32x64xbf16>
    %c0_5 = arith.constant 0 : index
    %c0_6 = arith.constant 0 : index
    %11 = vector.load %arg4[%c0_5, %c0_6] : memref<64x64xbf16, #tpu.memory_space<vmem>>, vector<64x64xbf16>
    %cst_7 = arith.constant dense<0.000000e+00> : vector<32x64xf32>
    %12 = tpu.matmul %10, %11, %cst_7 {dimension_numbers = #tpu.dot_dimension_numbers<[1], [0], [0], [1], [0, 0, 1, 1], [], []>} : vector<32x64xbf16>, vector<64x64xbf16>, vector<32x64xf32> -> vector<32x64xf32>
    %c0_8 = arith.constant 0 : index
    %c0_9 = arith.constant 0 : index
    %13 = vector.load %arg5[%c0_8, %c0_9] : memref<1x64xf32, #tpu.memory_space<vmem>>, vector<1x64xf32>
    %14 = vector.broadcast %13 : vector<1x64xf32> to vector<32x64xf32>
    %15 = arith.addf %12, %14 : vector<32x64xf32>
    %16 = arith.truncf %15 : vector<32x64xf32> to vector<32x64xbf16>
    %c0_10 = arith.constant 0 : index
    %c0_11 = arith.constant 0 : index
    %17 = vector.load %arg6[%c0_10, %c0_11] : memref<32x64xbf16, #tpu.memory_space<vmem>>, vector<32x64xbf16>
    tpu.vector_store %arg6[%c0_10, %c0_11], %16 {strides = array<i32>} : memref<32x64xbf16, #tpu.memory_space<vmem>>, vector<32x64xbf16>,
    return
  }
  func.func @transform_0(%arg0: i32) -> (i32, i32) {
    %c0_i32 = arith.constant 0 : i32
    %c0_i32_0 = arith.constant 0 : i32
    return %arg0, %c0_i32 : i32, i32
  }
  func.func @transform_1(%arg0: i32) -> (i32, i32) {
    %c0_i32 = arith.constant 0 : i32
    %c0_i32_0 = arith.constant 0 : i32
    %c0_i32_1 = arith.constant 0 : i32
    return %c0_i32, %c0_i32_0 : i32, i32
  }
  func.func @transform_2(%arg0: i32) -> (i32, i32) {
    %c0_i32 = arith.constant 0 : i32
    %c0_i32_0 = arith.constant 0 : i32
    %c0_i32_1 = arith.constant 0 : i32
    return %c0_i32, %c0_i32_0 : i32, i32
  }
  func.func @transform_3(%arg0: i32) -> (i32, i32) {
    %c0_i32 = arith.constant 0 : i32
    %c0_i32_0 = arith.constant 0 : i32
    %c0_i32_1 = arith.constant 0 : i32
    return %c0_i32, %c0_i32_0 : i32, i32
  }
  func.func @transform_4(%arg0: i32) -> (i32, i32) {
    %c0_i32 = arith.constant 0 : i32
    %c0_i32_0 = arith.constant 0 : i32
    %c0_i32_1 = arith.constant 0 : i32
    return %c0_i32, %c0_i32_0 : i32, i32
  }
  func.func @transform_5(%arg0: i32) -> (i32, i32) {
    %c0_i32 = arith.constant 0 : i32
    %c0_i32_0 = arith.constant 0 : i32
    return %arg0, %c0_i32 : i32, i32
  }
}

module attributes {stable_mosaic.version = 11 : i64} {
  func.func @_affine_relu_gemm_bias_kernel(%arg0: i32, %arg1: memref<8x256xbf16, #tpu.memory_space<vmem>>, %arg2: memref<1x256xf32, #tpu.memory_space<vmem>>, %arg3: memref<1x256xf32, #tpu.memory_space<vmem>>, %arg4: memref<256x64xbf16, #tpu.memory_space<vmem>>, %arg5: memref<1x64xf32, #tpu.memory_space<vmem>>, %arg6: memref<8x64xbf16, #tpu.memory_space<vmem>>) attributes {dimension_semantics = [#tpu.dimension_semantics<parallel>], iteration_bounds = array<i64: 1>, scalar_prefetch = 0 : i64, scratch_operands = 0 : i64, tpu.core_type = #tpu.core_type<tc>, window_params = [{transform_indices = @transform_0, window_bounds = array<i64: 8, 256>}, {pipeline_mode = #tpu.pipeline_mode<synchronous>, transform_indices = @transform_1, window_bounds = array<i64: 1, 256>}, {pipeline_mode = #tpu.pipeline_mode<synchronous>, transform_indices = @transform_2, window_bounds = array<i64: 1, 256>}, {pipeline_mode = #tpu.pipeline_mode<synchronous>, transform_indices = @transform_3, window_bounds = array<i64: 256, 64>}, {pipeline_mode = #tpu.pipeline_mode<synchronous>, transform_indices = @transform_4, window_bounds = array<i64: 1, 64>}, {transform_indices = @transform_5, window_bounds = array<i64: 8, 64>}]} {
    %c0 = arith.constant 0 : index
    %c0_0 = arith.constant 0 : index
    %0 = vector.load %arg1[%c0, %c0_0] : memref<8x256xbf16, #tpu.memory_space<vmem>>, vector<8x256xbf16>
    %1 = arith.extf %0 : vector<8x256xbf16> to vector<8x256xf32>
    %c0_1 = arith.constant 0 : index
    %c0_2 = arith.constant 0 : index
    %2 = vector.load %arg2[%c0_1, %c0_2] : memref<1x256xf32, #tpu.memory_space<vmem>>, vector<1x256xf32>
    %3 = vector.broadcast %2 : vector<1x256xf32> to vector<8x256xf32>
    %4 = arith.mulf %1, %3 : vector<8x256xf32>
    %c0_3 = arith.constant 0 : index
    %c0_4 = arith.constant 0 : index
    %5 = vector.load %arg3[%c0_3, %c0_4] : memref<1x256xf32, #tpu.memory_space<vmem>>, vector<1x256xf32>
    %6 = vector.broadcast %5 : vector<1x256xf32> to vector<8x256xf32>
    %7 = arith.addf %4, %6 : vector<8x256xf32>
    %cst = arith.constant 0.000000e+00 : f32
    %8 = vector.broadcast %cst : f32 to vector<8x256xf32>
    %9 = arith.maximumf %7, %8 : vector<8x256xf32>
    %10 = arith.truncf %9 : vector<8x256xf32> to vector<8x256xbf16>
    %c0_5 = arith.constant 0 : index
    %c0_6 = arith.constant 0 : index
    %11 = vector.load %arg4[%c0_5, %c0_6] : memref<256x64xbf16, #tpu.memory_space<vmem>>, vector<256x64xbf16>
    %cst_7 = arith.constant dense<0.000000e+00> : vector<8x64xf32>
    %12 = tpu.matmul %10, %11, %cst_7 {dimension_numbers = #tpu.dot_dimension_numbers<[1], [0], [0], [1], [0, 0, 1, 1], [], []>} : vector<8x256xbf16>, vector<256x64xbf16>, vector<8x64xf32> -> vector<8x64xf32>
    %c0_8 = arith.constant 0 : index
    %c0_9 = arith.constant 0 : index
    %13 = vector.load %arg5[%c0_8, %c0_9] : memref<1x64xf32, #tpu.memory_space<vmem>>, vector<1x64xf32>
    %14 = vector.broadcast %13 : vector<1x64xf32> to vector<8x64xf32>
    %15 = arith.addf %12, %14 : vector<8x64xf32>
    %16 = arith.truncf %15 : vector<8x64xf32> to vector<8x64xbf16>
    %c0_10 = arith.constant 0 : index
    %c0_11 = arith.constant 0 : index
    %17 = vector.load %arg6[%c0_10, %c0_11] : memref<8x64xbf16, #tpu.memory_space<vmem>>, vector<8x64xbf16>
    tpu.vector_store %arg6[%c0_10, %c0_11], %16 {strides = array<i32>} : memref<8x64xbf16, #tpu.memory_space<vmem>>, vector<8x64xbf16>,
    return
  }
  func.func @transform_0(%arg0: i32) -> (i32, i32) {
    %c0_i32 = arith.constant 0 : i32
    %c0_i32_0 = arith.constant 0 : i32
    return %arg0, %c0_i32 : i32, i32
  }
  func.func @transform_1(%arg0: i32) -> (i32, i32) {
    %c0_i32 = arith.constant 0 : i32
    %c0_i32_0 = arith.constant 0 : i32
    %c0_i32_1 = arith.constant 0 : i32
    return %c0_i32, %c0_i32_0 : i32, i32
  }
  func.func @transform_2(%arg0: i32) -> (i32, i32) {
    %c0_i32 = arith.constant 0 : i32
    %c0_i32_0 = arith.constant 0 : i32
    %c0_i32_1 = arith.constant 0 : i32
    return %c0_i32, %c0_i32_0 : i32, i32
  }
  func.func @transform_3(%arg0: i32) -> (i32, i32) {
    %c0_i32 = arith.constant 0 : i32
    %c0_i32_0 = arith.constant 0 : i32
    %c0_i32_1 = arith.constant 0 : i32
    return %c0_i32, %c0_i32_0 : i32, i32
  }
  func.func @transform_4(%arg0: i32) -> (i32, i32) {
    %c0_i32 = arith.constant 0 : i32
    %c0_i32_0 = arith.constant 0 : i32
    %c0_i32_1 = arith.constant 0 : i32
    return %c0_i32, %c0_i32_0 : i32, i32
  }
  func.func @transform_5(%arg0: i32) -> (i32, i32) {
    %c0_i32 = arith.constant 0 : i32
    %c0_i32_0 = arith.constant 0 : i32
    return %arg0, %c0_i32 : i32, i32
  }
}

</mosaic_0001>

<llo_original>
// kernel: multi_scale_patch_embedding.4
$region0: #{multi_scale_patch_embedding.4}
  #allocation0 [shape = 'u32[]', space=smem, size = 0x4, offset = 0x4, fixed_abs, tag = 'smem constant byte address 0x4 - core index']
  #allocation1 [shape = 'u32[144,128]{1,0:T(1,128)}', space=vmem, size = 0x12000, scoped, tag = 'internal scratch']
  %s0 = inlined_call_operand.vmem [shape: bf16[128,36], index: 0, kind: input, shape index: {}]
  %s1 = inlined_call_operand.hbm [shape: bf16[36,128], index: 1, kind: input, shape index: {}]
  %s2 = inlined_call_operand.vmem [shape: bf16[128,128], index: 2, kind: output, shape index: {0}]
  %s3 = inlined_call_operand.vmem [shape: f32[1,8,128], index: 3, kind: output, shape index: {1}]
  %s4 = inlined_call_operand.vmem [shape: f32[1,8,128], index: 4, kind: output, shape index: {2}]
  %5 = xla_tuple %s2, %s3, %s4
  %s6 = sld [smem:[#allocation0]]
  $region38: #{multi_scale_patch_embedding.4} parent=0
    _
  %s8 = ssub.s32 1, %s6
  %s9 = scalar_select 0, %s8, %s6
  $region1: #{multi_scale_patch_embedding.4} parent=0
    #allocation2 [shape = 'u8[10240]{0}', space=vmem, size = 0x2800, scoped, tag = 'input window, operand 1, single buffered']
    #allocation3 [shape = 's32[1]{0}', space=sflag, size = 0x4, scoped, tag = 'scoped memory for multi_scale_patch_embedding.4']
    %10 = vsyncpa [#allocation3], 0
    // Predicated region
    $region2: #{multi_scale_patch_embedding.4} parent=1 // pred_check
      _
    $region3: #{multi_scale_patch_embedding.4} parent=1 // pred_check_branch
      %12 = sbr.rel (0) target = $region5
    $region4: #{multi_scale_patch_embedding.4} parent=1 // pred_region
      _
    $region5: #{multi_scale_patch_embedding.4} parent=1 // pred_fallthru
      _
    // Predicated region
    $region6: #{multi_scale_patch_embedding.4} parent=1 // pred_check
      _
    $region7: #{multi_scale_patch_embedding.4} parent=1 // pred_check_branch
      %14 = sbr.rel (0) target = $region9
    $region8: #{multi_scale_patch_embedding.4} parent=1 // pred_region
      %s16 = ssub.s32 320, 320
      %17 = vsyncadd [#allocation3], %s16
      %s18 = sshll.u32 [#allocation2], 4
      %s19 = int_to_ptr.vmem [resolvable:$true] %s18
      %24 = dma.hbm_to_vmem [thread:$0]  %s1, 320, %s19, [#allocation3], 64, 64, 4
    $region9: #{multi_scale_patch_embedding.4} parent=1 // pred_fallthru
      _
    // Predicated region
    $region10: #{multi_scale_patch_embedding.4} parent=1 // pred_check
      _
    $region11: #{multi_scale_patch_embedding.4} parent=1 // pred_check_branch
      %26 = sbr.rel (0) target = $region13
    $region12: #{multi_scale_patch_embedding.4} parent=1 // pred_region
      %27 = dma.done [#allocation3], 320
    $region13: #{multi_scale_patch_embedding.4} parent=1 // pred_fallthru
      _
    %v29 = vld [vmem:[%s0] sm:$0xf]
    %v30 = vld [vmem:[%s0 + $0x4] sm:$0xf]
    %v31 = vld [vmem:[%s0 + $0x8] sm:$0xf]
    %v32 = vld [vmem:[%s0 + $0xc] sm:$0xf]
    %v33 = vld [vmem:[%s0 + $0x10] sm:$0xf]
    %v34 = vld [vmem:[%s0 + $0x14] sm:$0xf]
    %v35 = vld [vmem:[%s0 + $0x18] sm:$0xf]
    %v36 = vld [vmem:[%s0 + $0x1c] sm:$0xf]
    %v37 = vld [vmem:[%s0 + $0x20] sm:$0xf]
    %v38 = vld [vmem:[%s0 + $0x24] sm:$0xf]
    %v39 = vld [vmem:[%s0 + $0x28] sm:$0xf]
    %v40 = vld [vmem:[%s0 + $0x2c] sm:$0xf]
    %v41 = vld [vmem:[%s0 + $0x30] sm:$0xf]
    %v42 = vld [vmem:[%s0 + $0x34] sm:$0xf]
    %v43 = vld [vmem:[%s0 + $0x38] sm:$0xf]
    %v44 = vld [vmem:[%s0 + $0x3c] sm:$0xf]
    %v45 = vld [vmem:[#allocation2] sm:$0xf]
    %v46 = vld [vmem:[#allocation2 + $0x4] sm:$0xf]
    %v47 = vld [vmem:[#allocation2 + $0x8] sm:$0xf]
    %v48 = vld [vmem:[#allocation2 + $0xc] sm:$0xf]
    %v49 = vld [vmem:[#allocation2 + $0x10] sm:$0x3]
    %v66 = vunpack.c.l.b16 %v29
    %v67 = vunpack.c.l.b16 %v30
    %v68 = vunpack.c.l.b16 %v31
    %v69 = vunpack.c.l.b16 %v32
    %v70 = vunpack.c.l.b16 %v33
    %v71 = vunpack.c.l.b16 %v34
    %v72 = vunpack.c.l.b16 %v35
    %v73 = vunpack.c.l.b16 %v36
    %v74 = vunpack.c.l.b16 %v37
    %v75 = vunpack.c.l.b16 %v38
    %v76 = vunpack.c.l.b16 %v39
    %v77 = vunpack.c.l.b16 %v40
    %v78 = vunpack.c.l.b16 %v41
    %v79 = vunpack.c.l.b16 %v42
    %v80 = vunpack.c.l.b16 %v43
    %v81 = vunpack.c.l.b16 %v44
    %v82 = vpack.c.b16 %v67, %v66
    %v83 = vpack.c.b16 %v69, %v68
    %v84 = vpack.c.b16 %v71, %v70
    %v85 = vpack.c.b16 %v73, %v72
    %v86 = vpack.c.b16 %v75, %v74
    %v87 = vpack.c.b16 %v77, %v76
    %v88 = vpack.c.b16 %v79, %v78
    %v89 = vpack.c.b16 %v81, %v80
    %v95 = vunpack.c.l.b16 %v45
    %v96 = vunpack.c.l.b16 %v46
    %v97 = vunpack.c.l.b16 %v47
    %v98 = vunpack.c.l.b16 %v48
    %v99 = vunpack.c.l.b16 %v49
    %v100 = vpack.c.b16 %v96, %v95
    %v101 = vpack.c.b16 %v98, %v97
    %v102 = vpack.c.b16 %v99, %v99
    %vm105 = vcmask 293888
    %v107 = vsel %vm105, %v82, 0
    %v110 = vsel %vm105, %v83, 0
    %v113 = vsel %vm105, %v84, 0
    %v116 = vsel %vm105, %v85, 0
    %v119 = vsel %vm105, %v86, 0
    %v122 = vsel %vm105, %v87, 0
    %v125 = vsel %vm105, %v88, 0
    %v128 = vsel %vm105, %v89, 0
    %vm130 = vcmask 1041408
    %v132 = vsel %vm130, %v102, 0
    %134 = vmatprep.subr.bf16.mxu0 0
    %135 = vmatpush1.bf16.msra.mxu0 0
    %136 = vmatprep.subr.bf16.mxu0 0
    %137 = vmatpush1.bf16.msra.mxu0 0
    %138 = vmatprep.subr.bf16.mxu0 0
    %139 = vmatpush1.bf16.msra.mxu0 0
    %140 = vmatprep.subr.bf16.mxu0 0
    %141 = vmatpush1.bf16.msra.mxu0 0
    %142 = vmatprep.subr.bf16.mxu0 0
    %143 = vmatpush1.bf16.msra.mxu0 0
    %144 = vmatprep.subr.bf16.mxu0 0
    %145 = vmatpush1.bf16.msra.mxu0 %v132
    %146 = vmatprep.subr.bf16.mxu0 0
    %147 = vmatpush1.bf16.msra.mxu0 %v101
    %148 = vmatprep.subr.bf16.mxu0 0
    %149 = vmatpush1.bf16.msra.mxu0 %v100
    %150 = vmatprep.subr.bf16.mxu0 0
    %151 = vmatpush2.bf16.msra.mxu0 0
    %152 = vmatprep.subr.bf16.mxu0 0
    %153 = vmatpush2.bf16.msra.mxu0 0
    %154 = vmatprep.subr.bf16.mxu0 0
    %155 = vmatpush2.bf16.msra.mxu0 0
    %156 = vmatprep.subr.bf16.mxu0 0
    %157 = vmatpush2.bf16.msra.mxu0 0
    %158 = vmatprep.subr.bf16.mxu0 0
    %159 = vmatpush2.bf16.msra.mxu0 0
    %160 = vmatprep.subr.bf16.mxu0 0
    %161 = vmatpush2.bf16.msra.mxu0 0
    %162 = vmatprep.subr.bf16.mxu0 0
    %163 = vmatpush2.bf16.msra.mxu0 0
    %164 = vmatprep.subr.bf16.mxu0 0
    %165 = vmatpush2.bf16.msra.mxu0 0
    %166 = vmatprep.mubr.bf16.mxu0 0
    %167 = vmatmul.mubr.bf16.gmra.mxu0 %v107
    %v168 = vpop.f32.mrf.mxu0
    %v169 = vadd.f32 0.0, %v168
    %v170 = vpop.f32.mrf.mxu0
    %v171 = vpop.f32.mrf.mxu0
    %v172 = vadd.f32 0.0, %v171
    %v173 = vpop.f32.mrf.mxu0
    %174 = vmatprep.mubr.bf16.mxu0 0
    %175 = vmatmul.mubr.bf16.gmra.mxu0 %v110
    %v176 = vpop.f32.mrf.mxu0
    %v177 = vadd.f32 0.0, %v176
    %v178 = vpop.f32.mrf.mxu0
    %v179 = vpop.f32.mrf.mxu0
    %v180 = vadd.f32 0.0, %v179
    %v181 = vpop.f32.mrf.mxu0
    %182 = vmatprep.mubr.bf16.mxu0 0
    %183 = vmatmul.mubr.bf16.gmra.mxu0 %v113
    %v184 = vpop.f32.mrf.mxu0
    %v185 = vadd.f32 0.0, %v184
    %v186 = vpop.f32.mrf.mxu0
    %v187 = vpop.f32.mrf.mxu0
    %v188 = vadd.f32 0.0, %v187
    %v189 = vpop.f32.mrf.mxu0
    %190 = vmatprep.mubr.bf16.mxu0 0
    %191 = vmatmul.mubr.bf16.gmra.mxu0 %v116
    %v192 = vpop.f32.mrf.mxu0
    %v193 = vadd.f32 0.0, %v192
    %v194 = vpop.f32.mrf.mxu0
    %v195 = vpop.f32.mrf.mxu0
    %v196 = vadd.f32 0.0, %v195
    %v197 = vpop.f32.mrf.mxu0
    %198 = vmatprep.mubr.bf16.mxu0 0
    %199 = vmatmul.mubr.bf16.gmra.mxu0 %v119
    %v200 = vpop.f32.mrf.mxu0
    %v201 = vadd.f32 0.0, %v200
    %v202 = vpop.f32.mrf.mxu0
    %v203 = vpop.f32.mrf.mxu0
    %v204 = vadd.f32 0.0, %v203
    %v205 = vpop.f32.mrf.mxu0
    %206 = vmatprep.mubr.bf16.mxu0 0
    %207 = vmatmul.mubr.bf16.gmra.mxu0 %v122
    %v208 = vpop.f32.mrf.mxu0
    %v209 = vadd.f32 0.0, %v208
    %v210 = vpop.f32.mrf.mxu0
    %v211 = vpop.f32.mrf.mxu0
    %v212 = vadd.f32 0.0, %v211
    %v213 = vpop.f32.mrf.mxu0
    %214 = vmatprep.mubr.bf16.mxu0 0
    %215 = vmatmul.mubr.bf16.gmra.mxu0 %v125
    %v216 = vpop.f32.mrf.mxu0
    %v217 = vadd.f32 0.0, %v216
    %v218 = vpop.f32.mrf.mxu0
    %v219 = vpop.f32.mrf.mxu0
    %v220 = vadd.f32 0.0, %v219
    %v221 = vpop.f32.mrf.mxu0
    %222 = vmatprep.mubr.bf16.mxu0 0
    %223 = vmatmul.mubr.bf16.gmra.mxu0 %v128
    %v224 = vpop.f32.mrf.mxu0
    %v225 = vadd.f32 0.0, %v224
    %v226 = vpop.f32.mrf.mxu0
    %v227 = vpop.f32.mrf.mxu0
    %v228 = vadd.f32 0.0, %v227
    %v229 = vpop.f32.mrf.mxu0
    %230 = vdwg.mxu0
    %v231 = vpack.c.bf16 %v172, %v169
    %v232 = vpack.c.bf16 %v180, %v177
    %v233 = vpack.c.bf16 %v188, %v185
    %v234 = vpack.c.bf16 %v196, %v193
    %v235 = vpack.c.bf16 %v204, %v201
    %v236 = vpack.c.bf16 %v212, %v209
    %v237 = vpack.c.bf16 %v220, %v217
    %v238 = vpack.c.bf16 %v228, %v225
    %v247 = vunpack.c.l.b16 %v231
    %v248 = vunpack.c.h.b16 %v231
    %v249 = vunpack.c.l.b16 %v232
    %v250 = vunpack.c.h.b16 %v232
    %v251 = vunpack.c.l.b16 %v233
    %v252 = vunpack.c.h.b16 %v233
    %v253 = vunpack.c.l.b16 %v234
    %v254 = vunpack.c.h.b16 %v234
    %v255 = vunpack.c.l.b16 %v235
    %v256 = vunpack.c.h.b16 %v235
    %v257 = vunpack.c.l.b16 %v236
    %v258 = vunpack.c.h.b16 %v236
    %v259 = vunpack.c.l.b16 %v237
    %v260 = vunpack.c.h.b16 %v237
    %v261 = vunpack.c.l.b16 %v238
    %v262 = vunpack.c.h.b16 %v238
    %v263 = vpack.c.b16 %v247, %v247
    %v264 = vpack.c.b16 %v248, %v248
    %v265 = vpack.c.b16 %v249, %v249
    %v266 = vpack.c.b16 %v250, %v250
    %v267 = vpack.c.b16 %v251, %v251
    %v268 = vpack.c.b16 %v252, %v252
    %v269 = vpack.c.b16 %v253, %v253
    %v270 = vpack.c.b16 %v254, %v254
    %v271 = vpack.c.b16 %v255, %v255
    %v272 = vpack.c.b16 %v256, %v256
    %v273 = vpack.c.b16 %v257, %v257
    %v274 = vpack.c.b16 %v258, %v258
    %v275 = vpack.c.b16 %v259, %v259
    %v276 = vpack.c.b16 %v260, %v260
    %v277 = vpack.c.b16 %v261, %v261
    %v278 = vpack.c.b16 %v262, %v262
    %295 = vst [vmem:[%s2] sm:$0xf] %v263
    %296 = vst [vmem:[%s2 + $0x4] sm:$0xf] %v264
    %297 = vst [vmem:[%s2 + $0x8] sm:$0xf] %v265
    %298 = vst [vmem:[%s2 + $0xc] sm:$0xf] %v266
    %299 = vst [vmem:[%s2 + $0x10] sm:$0xf] %v267
    %300 = vst [vmem:[%s2 + $0x14] sm:$0xf] %v268
    %301 = vst [vmem:[%s2 + $0x18] sm:$0xf] %v269
    %302 = vst [vmem:[%s2 + $0x1c] sm:$0xf] %v270
    %303 = vst [vmem:[%s2 + $0x20] sm:$0xf] %v271
    %304 = vst [vmem:[%s2 + $0x24] sm:$0xf] %v272
    %305 = vst [vmem:[%s2 + $0x28] sm:$0xf] %v273
    %306 = vst [vmem:[%s2 + $0x2c] sm:$0xf] %v274
    %307 = vst [vmem:[%s2 + $0x30] sm:$0xf] %v275
    %308 = vst [vmem:[%s2 + $0x34] sm:$0xf] %v276
    %309 = vst [vmem:[%s2 + $0x38] sm:$0xf] %v277
    %310 = vst [vmem:[%s2 + $0x3c] sm:$0xf] %v278
    %v311 = vadd.f32 %v169, %v172
    %v312 = vadd.f32 %v311, %v177
    %v313 = vadd.f32 %v312, %v180
    %v314 = vadd.f32 %v313, %v185
    %v315 = vadd.f32 %v314, %v188
    %v316 = vadd.f32 %v315, %v193
    %v317 = vadd.f32 %v316, %v196
    %v318 = vadd.f32 %v317, %v201
    %v319 = vadd.f32 %v318, %v204
    %v320 = vadd.f32 %v319, %v209
    %v321 = vadd.f32 %v320, %v212
    %v322 = vadd.f32 %v321, %v217
    %v323 = vadd.f32 %v322, %v220
    %v324 = vadd.f32 %v323, %v225
    %v325 = vadd.f32 %v324, %v228
    %v326 = vrot.slane %v325, 4
    %v327 = vadd.f32 %v325, %v326
    %v328 = vrot.slane %v327, 2
    %v329 = vadd.f32 %v327, %v328
    %v330 = vrot.slane %v329, 1
    %v331 = vadd.f32 %v329, %v330
    %v332 = vmul.f32 %v169, %v169
    %v333 = vmul.f32 %v172, %v172
    %v334 = vmul.f32 %v177, %v177
    %v335 = vmul.f32 %v180, %v180
    %v336 = vmul.f32 %v185, %v185
    %v337 = vmul.f32 %v188, %v188
    %v338 = vmul.f32 %v193, %v193
    %v339 = vmul.f32 %v196, %v196
    %v340 = vmul.f32 %v201, %v201
    %v341 = vmul.f32 %v204, %v204
    %v342 = vmul.f32 %v209, %v209
    %v343 = vmul.f32 %v212, %v212
    %v344 = vmul.f32 %v217, %v217
    %v345 = vmul.f32 %v220, %v220
    %v346 = vmul.f32 %v225, %v225
    %v347 = vmul.f32 %v228, %v228
    %v348 = vadd.f32 %v332, %v333
    %v349 = vadd.f32 %v348, %v334
    %v350 = vadd.f32 %v349, %v335
    %v351 = vadd.f32 %v350, %v336
    %v352 = vadd.f32 %v351, %v337
    %v353 = vadd.f32 %v352, %v338
    %v354 = vadd.f32 %v353, %v339
    %v355 = vadd.f32 %v354, %v340
    %v356 = vadd.f32 %v355, %v341
    %v357 = vadd.f32 %v356, %v342
    %v358 = vadd.f32 %v357, %v343
    %v359 = vadd.f32 %v358, %v344
    %v360 = vadd.f32 %v359, %v345
    %v361 = vadd.f32 %v360, %v346
    %v362 = vadd.f32 %v361, %v347
    %v363 = vrot.slane %v362, 4
    %v364 = vadd.f32 %v362, %v363
    %v365 = vrot.slane %v364, 2
    %v366 = vadd.f32 %v364, %v365
    %v367 = vrot.slane %v366, 1
    %v368 = vadd.f32 %v366, %v367
    %369 = vst [vmem:[%s3] sm:$0xff] %v331
    %370 = vst [vmem:[%s4] sm:$0xff] %v368
    // Predicated region
    $region14: #{multi_scale_patch_embedding.4} parent=1 // pred_check
      _
    $region15: #{multi_scale_patch_embedding.4} parent=1 // pred_check_branch
      %372 = sbr.rel (0) target = $region17
    $region16: #{multi_scale_patch_embedding.4} parent=1 // pred_region
      _
    $region17: #{multi_scale_patch_embedding.4} parent=1 // pred_fallthru
      _
    // Predicated region
    $region18: #{multi_scale_patch_embedding.4} parent=1 // pred_check
      _
    $region19: #{multi_scale_patch_embedding.4} parent=1 // pred_check_branch
      %374 = sbr.rel (0) target = $region21
    $region20: #{multi_scale_patch_embedding.4} parent=1 // pred_region
      _
    $region21: #{multi_scale_patch_embedding.4} parent=1 // pred_fallthru
      _
    // Predicated region
    $region22: #{multi_scale_patch_embedding.4} parent=1 // pred_check
      _
    $region23: #{multi_scale_patch_embedding.4} parent=1 // pred_check_branch
      %376 = sbr.rel (0) target = $region25
    $region24: #{multi_scale_patch_embedding.4} parent=1 // pred_region
      _
    $region25: #{multi_scale_patch_embedding.4} parent=1 // pred_fallthru
      _
    // Predicated region
    $region26: #{multi_scale_patch_embedding.4} parent=1 // pred_check
      _
    $region27: #{multi_scale_patch_embedding.4} parent=1 // pred_check_branch
      %378 = sbr.rel (0) target = $region29
    $region28: #{multi_scale_patch_embedding.4} parent=1 // pred_region
      _
    $region29: #{multi_scale_patch_embedding.4} parent=1 // pred_fallthru
      _
    // Predicated region
    $region30: #{multi_scale_patch_embedding.4} parent=1 // pred_check
      _
    $region31: #{multi_scale_patch_embedding.4} parent=1 // pred_check_branch
      %380 = sbr.rel (0) target = $region33
    $region32: #{multi_scale_patch_embedding.4} parent=1 // pred_region
      _
    $region33: #{multi_scale_patch_embedding.4} parent=1 // pred_fallthru
      _
    // Predicated region
    $region34: #{multi_scale_patch_embedding.4} parent=1 // pred_check
      _
    $region35: #{multi_scale_patch_embedding.4} parent=1 // pred_check_branch
      %382 = sbr.rel (0) target = $region37
    $region36: #{multi_scale_patch_embedding.4} parent=1 // pred_region
      _
    $region37: #{multi_scale_patch_embedding.4} parent=1 // pred_fallthru
      _
    %383 = vsyncpa [#allocation3], 1

// kernel: multi_scale_patch_embedding.6
$region0: #{multi_scale_patch_embedding.6}
  #allocation0 [shape = 'u32[]', space=smem, size = 0x4, offset = 0x4, fixed_abs, tag = 'smem constant byte address 0x4 - core index']
  #allocation1 [shape = 'u32[144,128]{1,0:T(1,128)}', space=vmem, size = 0x12000, scoped, tag = 'internal scratch']
  %s0 = inlined_call_operand.vmem [shape: bf16[32,64], index: 0, kind: input, shape index: {}]
  %s1 = inlined_call_operand.vmem [shape: f32[1,64], index: 1, kind: input, shape index: {}]
  %s2 = inlined_call_operand.vmem [shape: f32[1,64], index: 2, kind: input, shape index: {}]
  %s3 = inlined_call_operand.vmem [shape: bf16[64,64], index: 3, kind: input, shape index: {}]
  %s4 = inlined_call_operand.vmem [shape: f32[1,64], index: 4, kind: input, shape index: {}]
  %s5 = inlined_call_operand.vmem [shape: bf16[32,64], index: 5, kind: output, shape index: {}]
  %s6 = sld [smem:[#allocation0]]
  $region30: #{multi_scale_patch_embedding.6} parent=0
    _
  %s8 = ssub.s32 1, %s6
  %s9 = scalar_select 0, %s8, %s6
  // Predicated region
  $region2: #{multi_scale_patch_embedding.6} parent=0 // pred_check
    _
  $region3: #{multi_scale_patch_embedding.6} parent=0 // pred_check_branch
    %11 = sbr.rel (0) target = $region5
  $region4: #{multi_scale_patch_embedding.6} parent=0 // pred_region
    _
  $region5: #{multi_scale_patch_embedding.6} parent=0 // pred_fallthru
    _
  // Predicated region
  $region6: #{multi_scale_patch_embedding.6} parent=0 // pred_check
    _
  $region7: #{multi_scale_patch_embedding.6} parent=0 // pred_check_branch
    %13 = sbr.rel (0) target = $region9
  $region8: #{multi_scale_patch_embedding.6} parent=0 // pred_region
    _
  $region9: #{multi_scale_patch_embedding.6} parent=0 // pred_fallthru
    _
  // Predicated region
  $region10: #{multi_scale_patch_embedding.6} parent=0 // pred_check
    _
  $region11: #{multi_scale_patch_embedding.6} parent=0 // pred_check_branch
    %15 = sbr.rel (0) target = $region13
  $region12: #{multi_scale_patch_embedding.6} parent=0 // pred_region
    _
  $region13: #{multi_scale_patch_embedding.6} parent=0 // pred_fallthru
    _
  // Predicated region
  $region14: #{multi_scale_patch_embedding.6} parent=0 // pred_check
    _
  $region15: #{multi_scale_patch_embedding.6} parent=0 // pred_check_branch
    %17 = sbr.rel (0) target = $region17
  $region16: #{multi_scale_patch_embedding.6} parent=0 // pred_region
    _
  $region17: #{multi_scale_patch_embedding.6} parent=0 // pred_fallthru
    _
  // Predicated region
  $region18: #{multi_scale_patch_embedding.6} parent=0 // pred_check
    _
  $region19: #{multi_scale_patch_embedding.6} parent=0 // pred_check_branch
    %19 = sbr.rel (0) target = $region21
  $region20: #{multi_scale_patch_embedding.6} parent=0 // pred_region
    _
  $region21: #{multi_scale_patch_embedding.6} parent=0 // pred_fallthru
    _
  %v21 = vld [vmem:[%s0] sm:$0xf]
  %v22 = vld [vmem:[%s0 + $0x4] sm:$0xf]
  %v23 = vld [vmem:[%s0 + $0x8] sm:$0xf]
  %v24 = vld [vmem:[%s0 + $0xc] sm:$0xf]
  %v25 = vunpack.c.l.bf16 %v21
  %v26 = vunpack.c.l.bf16 %v22
  %v27 = vunpack.c.l.bf16 %v23
  %v28 = vunpack.c.l.bf16 %v24
  %v29 = vld [vmem:[%s1] sm:$0x1]
  %v31 = vlaneseq
  %v32 = vshrl.u32 %v31, 7
  %v33 = vsub.s32 0, %v32
  %v34 = vrot.slane %v29, %v33
  %v36 = vmul.f32 %v25, %v34
  %v37 = vmul.f32 %v26, %v34
  %v38 = vmul.f32 %v27, %v34
  %v39 = vmul.f32 %v28, %v34
  %v40 = vld [vmem:[%s2] sm:$0x1]
  %v42 = vlaneseq
  %v43 = vshrl.u32 %v42, 7
  %v44 = vsub.s32 0, %v43
  %v45 = vrot.slane %v40, %v44
  %v47 = vadd.f32 %v36, %v45
  %v48 = vadd.f32 %v37, %v45
  %v49 = vadd.f32 %v38, %v45
  %v50 = vadd.f32 %v39, %v45
  %v51 = vmax.f32 %v47, 0.0
  %v52 = vmax.f32 %v48, 0.0
  %v53 = vmax.f32 %v49, 0.0
  %v54 = vmax.f32 %v50, 0.0
  %v55 = vpack.c.bf16 %v52, %v51
  %v56 = vpack.c.bf16 %v54, %v53
  %v57 = vld [vmem:[%s3] sm:$0xf]
  %v58 = vld [vmem:[%s3 + $0x4] sm:$0xf]
  %v59 = vld [vmem:[%s3 + $0x8] sm:$0xf]
  %v60 = vld [vmem:[%s3 + $0xc] sm:$0xf]
  %v61 = vld [vmem:[%s3 + $0x10] sm:$0xf]
  %v62 = vld [vmem:[%s3 + $0x14] sm:$0xf]
  %v63 = vld [vmem:[%s3 + $0x18] sm:$0xf]
  %v64 = vld [vmem:[%s3 + $0x1c] sm:$0xf]
  %v65 = vld [vmem:[%s4] sm:$0x1]
  %v67 = vlaneseq
  %v68 = vshrl.u32 %v67, 7
  %v69 = vsub.s32 0, %v68
  %v70 = vrot.slane %v65, %v69
  %v80 = vunpack.c.l.b16 %v57
  %v81 = vunpack.c.l.b16 %v58
  %v82 = vunpack.c.l.b16 %v59
  %v83 = vunpack.c.l.b16 %v60
  %v84 = vunpack.c.l.b16 %v61
  %v85 = vunpack.c.l.b16 %v62
  %v86 = vunpack.c.l.b16 %v63
  %v87 = vunpack.c.l.b16 %v64
  %v88 = vpack.c.b16 %v81, %v80
  %v89 = vpack.c.b16 %v83, %v82
  %v90 = vpack.c.b16 %v85, %v84
  %v91 = vpack.c.b16 %v87, %v86
  %vm96 = vcmask 523264
  %v98 = vsel %vm96, %v55, 0
  %v101 = vsel %vm96, %v56, 0
  %103 = vmatprep.subr.bf16.mxu0 0
  %104 = vmatpush1.bf16.msra.mxu0 0
  %105 = vmatprep.subr.bf16.mxu0 0
  %106 = vmatpush1.bf16.msra.mxu0 0
  %107 = vmatprep.subr.bf16.mxu0 0
  %108 = vmatpush1.bf16.msra.mxu0 0
  %109 = vmatprep.subr.bf16.mxu0 0
  %110 = vmatpush1.bf16.msra.mxu0 0
  %111 = vmatprep.subr.bf16.mxu0 0
  %112 = vmatpush1.bf16.msra.mxu0 %v91
  %113 = vmatprep.subr.bf16.mxu0 0
  %114 = vmatpush1.bf16.msra.mxu0 %v90
  %115 = vmatprep.subr.bf16.mxu0 0
  %116 = vmatpush1.bf16.msra.mxu0 %v89
  %117 = vmatprep.subr.bf16.mxu0 0
  %118 = vmatpush1.bf16.msra.mxu0 %v88
  %119 = vmatprep.subr.bf16.mxu0 0
  %120 = vmatpush2.bf16.msra.mxu0 0
  %121 = vmatprep.subr.bf16.mxu0 0
  %122 = vmatpush2.bf16.msra.mxu0 0
  %123 = vmatprep.subr.bf16.mxu0 0
  %124 = vmatpush2.bf16.msra.mxu0 0
  %125 = vmatprep.subr.bf16.mxu0 0
  %126 = vmatpush2.bf16.msra.mxu0 0
  %127 = vmatprep.subr.bf16.mxu0 0
  %128 = vmatpush2.bf16.msra.mxu0 0
  %129 = vmatprep.subr.bf16.mxu0 0
  %130 = vmatpush2.bf16.msra.mxu0 0
  %131 = vmatprep.subr.bf16.mxu0 0
  %132 = vmatpush2.bf16.msra.mxu0 0
  %133 = vmatprep.subr.bf16.mxu0 0
  %134 = vmatpush2.bf16.msra.mxu0 0
  %135 = vmatprep.mubr.bf16.mxu0 0
  %136 = vmatmul.mubr.bf16.gmra.mxu0 %v98
  %v137 = vpop.f32.mrf.mxu0
  %v138 = vadd.f32 %v70, %v137
  %v139 = vpop.f32.mrf.mxu0
  %v140 = vpop.f32.mrf.mxu0
  %v141 = vadd.f32 %v70, %v140
  %v142 = vpop.f32.mrf.mxu0
  %143 = vmatprep.mubr.bf16.mxu0 0
  %144 = vmatmul.mubr.bf16.gmra.mxu0 %v101
  %v145 = vpop.f32.mrf.mxu0
  %v146 = vadd.f32 %v70, %v145
  %v147 = vpop.f32.mrf.mxu0
  %v148 = vpop.f32.mrf.mxu0
  %v149 = vadd.f32 %v70, %v148
  %v150 = vpop.f32.mrf.mxu0
  %151 = vdwg.mxu0
  %v152 = vpack.c.bf16 %v141, %v138
  %v153 = vpack.c.bf16 %v149, %v146
  %v156 = vunpack.c.l.b16 %v152
  %v157 = vunpack.c.h.b16 %v152
  %v158 = vunpack.c.l.b16 %v153
  %v159 = vunpack.c.h.b16 %v153
  %v160 = vpack.c.b16 %v156, %v156
  %v161 = vpack.c.b16 %v157, %v157
  %v162 = vpack.c.b16 %v158, %v158
  %v163 = vpack.c.b16 %v159, %v159
  %vm168 = vcmask 519168
  %169 = vst.msk [vmem:[%s5] sm:$0xf] %vm168, %v160
  %170 = vst.msk [vmem:[%s5 + $0x4] sm:$0xf] %vm168, %v161
  %171 = vst.msk [vmem:[%s5 + $0x8] sm:$0xf] %vm168, %v162
  %172 = vst.msk [vmem:[%s5 + $0xc] sm:$0xf] %vm168, %v163
  // Predicated region
  $region22: #{multi_scale_patch_embedding.6} parent=0 // pred_check
    _
  $region23: #{multi_scale_patch_embedding.6} parent=0 // pred_check_branch
    %174 = sbr.rel (0) target = $region25
  $region24: #{multi_scale_patch_embedding.6} parent=0 // pred_region
    _
  $region25: #{multi_scale_patch_embedding.6} parent=0 // pred_fallthru
    _
  // Predicated region
  $region26: #{multi_scale_patch_embedding.6} parent=0 // pred_check
    _
  $region27: #{multi_scale_patch_embedding.6} parent=0 // pred_check_branch
    %176 = sbr.rel (0) target = $region29
  $region28: #{multi_scale_patch_embedding.6} parent=0 // pred_region
    _
  $region29: #{multi_scale_patch_embedding.6} parent=0 // pred_fallthru
    _

// kernel: multi_scale_patch_embedding.5
$region0: #{multi_scale_patch_embedding.5}
  #allocation0 [shape = 'u32[]', space=smem, size = 0x4, offset = 0x4, fixed_abs, tag = 'smem constant byte address 0x4 - core index']
  #allocation1 [shape = 'u32[144,128]{1,0:T(1,128)}', space=vmem, size = 0x12000, scoped, tag = 'internal scratch']
  %s0 = inlined_call_operand.vmem [shape: bf16[32,1152], index: 0, kind: input, shape index: {}]
  %s1 = inlined_call_operand.vmem [shape: bf16[1152,128], index: 1, kind: input, shape index: {}]
  %s2 = inlined_call_operand.vmem [shape: bf16[32,128], index: 2, kind: output, shape index: {0}]
  %s3 = inlined_call_operand.vmem [shape: f32[1,8,128], index: 3, kind: output, shape index: {1}]
  %s4 = inlined_call_operand.vmem [shape: f32[1,8,128], index: 4, kind: output, shape index: {2}]
  %5 = xla_tuple %s2, %s3, %s4
  %s6 = sld [smem:[#allocation0]]
  $region34: #{multi_scale_patch_embedding.5} parent=0
    _
  %s8 = ssub.s32 1, %s6
  %s9 = scalar_select 0, %s8, %s6
  // Predicated region
  $region2: #{multi_scale_patch_embedding.5} parent=0 // pred_check
    _
  $region3: #{multi_scale_patch_embedding.5} parent=0 // pred_check_branch
    %11 = sbr.rel (0) target = $region5
  $region4: #{multi_scale_patch_embedding.5} parent=0 // pred_region
    _
  $region5: #{multi_scale_patch_embedding.5} parent=0 // pred_fallthru
    _
  // Predicated region
  $region6: #{multi_scale_patch_embedding.5} parent=0 // pred_check
    _
  $region7: #{multi_scale_patch_embedding.5} parent=0 // pred_check_branch
    %13 = sbr.rel (0) target = $region9
  $region8: #{multi_scale_patch_embedding.5} parent=0 // pred_region
    _
  $region9: #{multi_scale_patch_embedding.5} parent=0 // pred_fallthru
    _
  %v15 = vld [vmem:[%s0] sm:$0xff]
  %v16 = vld [vmem:[%s0 + $0x8] sm:$0xff]
  %v17 = vld [vmem:[%s0 + $0x10] sm:$0xff]
  %v18 = vld [vmem:[%s0 + $0x18] sm:$0xff]
  %v19 = vld [vmem:[%s0 + $0x20] sm:$0xf]
  %v20 = vld [vmem:[%s0 + $0x24] sm:$0xff]
  %v21 = vld [vmem:[%s0 + $0x2c] sm:$0xff]
  %v22 = vld [vmem:[%s0 + $0x34] sm:$0xff]
  %v23 = vld [vmem:[%s0 + $0x3c] sm:$0xff]
  %v24 = vld [vmem:[%s0 + $0x44] sm:$0xf]
  %v25 = vld [vmem:[%s0 + $0x48] sm:$0xff]
  %v26 = vld [vmem:[%s0 + $0x50] sm:$0xff]
  %v27 = vld [vmem:[%s0 + $0x58] sm:$0xff]
  %v28 = vld [vmem:[%s0 + $0x60] sm:$0xff]
  %v29 = vld [vmem:[%s0 + $0x68] sm:$0xf]
  %v30 = vld [vmem:[%s0 + $0x6c] sm:$0xff]
  %v31 = vld [vmem:[%s0 + $0x74] sm:$0xff]
  %v32 = vld [vmem:[%s0 + $0x7c] sm:$0xff]
  %v33 = vld [vmem:[%s0 + $0x84] sm:$0xff]
  %v34 = vld [vmem:[%s0 + $0x8c] sm:$0xf]
  %v35 = vld [vmem:[%s1] sm:$0xf]
  %v36 = vld [vmem:[%s1 + $0x4] sm:$0xf]
  %v37 = vld [vmem:[%s1 + $0x8] sm:$0xf]
  %v38 = vld [vmem:[%s1 + $0xc] sm:$0xf]
  %v39 = vld [vmem:[%s1 + $0x10] sm:$0xf]
  %v40 = vld [vmem:[%s1 + $0x14] sm:$0xf]
  %v41 = vld [vmem:[%s1 + $0x18] sm:$0xf]
  %v42 = vld [vmem:[%s1 + $0x1c] sm:$0xf]
  %v43 = vld [vmem:[%s1 + $0x20] sm:$0xf]
  %v44 = vld [vmem:[%s1 + $0x24] sm:$0xf]
  %v45 = vld [vmem:[%s1 + $0x28] sm:$0xf]
  %v46 = vld [vmem:[%s1 + $0x2c] sm:$0xf]
  %v47 = vld [vmem:[%s1 + $0x30] sm:$0xf]
  %v48 = vld [vmem:[%s1 + $0x34] sm:$0xf]
  %v49 = vld [vmem:[%s1 + $0x38] sm:$0xf]
  %v50 = vld [vmem:[%s1 + $0x3c] sm:$0xf]
  %v51 = vld [vmem:[%s1 + $0x40] sm:$0xf]
  %v52 = vld [vmem:[%s1 + $0x44] sm:$0xf]
  %v53 = vld [vmem:[%s1 + $0x48] sm:$0xf]
  %v54 = vld [vmem:[%s1 + $0x4c] sm:$0xf]
  %v55 = vld [vmem:[%s1 + $0x50] sm:$0xf]
  %v56 = vld [vmem:[%s1 + $0x54] sm:$0xf]
  %v57 = vld [vmem:[%s1 + $0x58] sm:$0xf]
  %v58 = vld [vmem:[%s1 + $0x5c] sm:$0xf]
  %v59 = vld [vmem:[%s1 + $0x60] sm:$0xf]
  %v60 = vld [vmem:[%s1 + $0x64] sm:$0xf]
  %v61 = vld [vmem:[%s1 + $0x68] sm:$0xf]
  %v62 = vld [vmem:[%s1 + $0x6c] sm:$0xf]
  %v63 = vld [vmem:[%s1 + $0x70] sm:$0xf]
  %v64 = vld [vmem:[%s1 + $0x74] sm:$0xf]
  %v65 = vld [vmem:[%s1 + $0x78] sm:$0xf]
  %v66 = vld [vmem:[%s1 + $0x7c] sm:$0xf]
  %v67 = vld [vmem:[%s1 + $0x80] sm:$0xf]
  %v68 = vld [vmem:[%s1 + $0x84] sm:$0xf]
  %v69 = vld [vmem:[%s1 + $0x88] sm:$0xf]
  %v70 = vld [vmem:[%s1 + $0x8c] sm:$0xf]
  %v71 = vld [vmem:[%s1 + $0x90] sm:$0xf]
  %v72 = vld [vmem:[%s1 + $0x94] sm:$0xf]
  %v73 = vld [vmem:[%s1 + $0x98] sm:$0xf]
  %v74 = vld [vmem:[%s1 + $0x9c] sm:$0xf]
  %v75 = vld [vmem:[%s1 + $0xa0] sm:$0xf]
  %v76 = vld [vmem:[%s1 + $0xa4] sm:$0xf]
  %v77 = vld [vmem:[%s1 + $0xa8] sm:$0xf]
  %v78 = vld [vmem:[%s1 + $0xac] sm:$0xf]
  %v79 = vld [vmem:[%s1 + $0xb0] sm:$0xf]
  %v80 = vld [vmem:[%s1 + $0xb4] sm:$0xf]
  %v81 = vld [vmem:[%s1 + $0xb8] sm:$0xf]
  %v82 = vld [vmem:[%s1 + $0xbc] sm:$0xf]
  %v83 = vld [vmem:[%s1 + $0xc0] sm:$0xf]
  %v84 = vld [vmem:[%s1 + $0xc4] sm:$0xf]
  %v85 = vld [vmem:[%s1 + $0xc8] sm:$0xf]
  %v86 = vld [vmem:[%s1 + $0xcc] sm:$0xf]
  %v87 = vld [vmem:[%s1 + $0xd0] sm:$0xf]
  %v88 = vld [vmem:[%s1 + $0xd4] sm:$0xf]
  %v89 = vld [vmem:[%s1 + $0xd8] sm:$0xf]
  %v90 = vld [vmem:[%s1 + $0xdc] sm:$0xf]
  %v91 = vld [vmem:[%s1 + $0xe0] sm:$0xf]
  %v92 = vld [vmem:[%s1 + $0xe4] sm:$0xf]
  %v93 = vld [vmem:[%s1 + $0xe8] sm:$0xf]
  %v94 = vld [vmem:[%s1 + $0xec] sm:$0xf]
  %v95 = vld [vmem:[%s1 + $0xf0] sm:$0xf]
  %v96 = vld [vmem:[%s1 + $0xf4] sm:$0xf]
  %v97 = vld [vmem:[%s1 + $0xf8] sm:$0xf]
  %v98 = vld [vmem:[%s1 + $0xfc] sm:$0xf]
  %v99 = vld [vmem:[%s1 + $0x100] sm:$0xf]
  %v100 = vld [vmem:[%s1 + $0x104] sm:$0xf]
  %v101 = vld [vmem:[%s1 + $0x108] sm:$0xf]
  %v102 = vld [vmem:[%s1 + $0x10c] sm:$0xf]
  %v103 = vld [vmem:[%s1 + $0x110] sm:$0xf]
  %v104 = vld [vmem:[%s1 + $0x114] sm:$0xf]
  %v105 = vld [vmem:[%s1 + $0x118] sm:$0xf]
  %v106 = vld [vmem:[%s1 + $0x11c] sm:$0xf]
  %v107 = vld [vmem:[%s1 + $0x120] sm:$0xf]
  %v108 = vld [vmem:[%s1 + $0x124] sm:$0xf]
  %v109 = vld [vmem:[%s1 + $0x128] sm:$0xf]
  %v110 = vld [vmem:[%s1 + $0x12c] sm:$0xf]
  %v111 = vld [vmem:[%s1 + $0x130] sm:$0xf]
  %v112 = vld [vmem:[%s1 + $0x134] sm:$0xf]
  %v113 = vld [vmem:[%s1 + $0x138] sm:$0xf]
  %v114 = vld [vmem:[%s1 + $0x13c] sm:$0xf]
  %v115 = vld [vmem:[%s1 + $0x140] sm:$0xf]
  %v116 = vld [vmem:[%s1 + $0x144] sm:$0xf]
  %v117 = vld [vmem:[%s1 + $0x148] sm:$0xf]
  %v118 = vld [vmem:[%s1 + $0x14c] sm:$0xf]
  %v119 = vld [vmem:[%s1 + $0x150] sm:$0xf]
  %v120 = vld [vmem:[%s1 + $0x154] sm:$0xf]
  %v121 = vld [vmem:[%s1 + $0x158] sm:$0xf]
  %v122 = vld [vmem:[%s1 + $0x15c] sm:$0xf]
  %v123 = vld [vmem:[%s1 + $0x160] sm:$0xf]
  %v124 = vld [vmem:[%s1 + $0x164] sm:$0xf]
  %v125 = vld [vmem:[%s1 + $0x168] sm:$0xf]
  %v126 = vld [vmem:[%s1 + $0x16c] sm:$0xf]
  %v127 = vld [vmem:[%s1 + $0x170] sm:$0xf]
  %v128 = vld [vmem:[%s1 + $0x174] sm:$0xf]
  %v129 = vld [vmem:[%s1 + $0x178] sm:$0xf]
  %v130 = vld [vmem:[%s1 + $0x17c] sm:$0xf]
  %v131 = vld [vmem:[%s1 + $0x180] sm:$0xf]
  %v132 = vld [vmem:[%s1 + $0x184] sm:$0xf]
  %v133 = vld [vmem:[%s1 + $0x188] sm:$0xf]
  %v134 = vld [vmem:[%s1 + $0x18c] sm:$0xf]
  %v135 = vld [vmem:[%s1 + $0x190] sm:$0xf]
  %v136 = vld [vmem:[%s1 + $0x194] sm:$0xf]
  %v137 = vld [vmem:[%s1 + $0x198] sm:$0xf]
  %v138 = vld [vmem:[%s1 + $0x19c] sm:$0xf]
  %v139 = vld [vmem:[%s1 + $0x1a0] sm:$0xf]
  %v140 = vld [vmem:[%s1 + $0x1a4] sm:$0xf]
  %v141 = vld [vmem:[%s1 + $0x1a8] sm:$0xf]
  %v142 = vld [vmem:[%s1 + $0x1ac] sm:$0xf]
  %v143 = vld [vmem:[%s1 + $0x1b0] sm:$0xf]
  %v144 = vld [vmem:[%s1 + $0x1b4] sm:$0xf]
  %v145 = vld [vmem:[%s1 + $0x1b8] sm:$0xf]
  %v146 = vld [vmem:[%s1 + $0x1bc] sm:$0xf]
  %v147 = vld [vmem:[%s1 + $0x1c0] sm:$0xf]
  %v148 = vld [vmem:[%s1 + $0x1c4] sm:$0xf]
  %v149 = vld [vmem:[%s1 + $0x1c8] sm:$0xf]
  %v150 = vld [vmem:[%s1 + $0x1cc] sm:$0xf]
  %v151 = vld [vmem:[%s1 + $0x1d0] sm:$0xf]
  %v152 = vld [vmem:[%s1 + $0x1d4] sm:$0xf]
  %v153 = vld [vmem:[%s1 + $0x1d8] sm:$0xf]
  %v154 = vld [vmem:[%s1 + $0x1dc] sm:$0xf]
  %v155 = vld [vmem:[%s1 + $0x1e0] sm:$0xf]
  %v156 = vld [vmem:[%s1 + $0x1e4] sm:$0xf]
  %v157 = vld [vmem:[%s1 + $0x1e8] sm:$0xf]
  %v158 = vld [vmem:[%s1 + $0x1ec] sm:$0xf]
  %v159 = vld [vmem:[%s1 + $0x1f0] sm:$0xf]
  %v160 = vld [vmem:[%s1 + $0x1f4] sm:$0xf]
  %v161 = vld [vmem:[%s1 + $0x1f8] sm:$0xf]
  %v162 = vld [vmem:[%s1 + $0x1fc] sm:$0xf]
  %v163 = vld [vmem:[%s1 + $0x200] sm:$0xf]
  %v164 = vld [vmem:[%s1 + $0x204] sm:$0xf]
  %v165 = vld [vmem:[%s1 + $0x208] sm:$0xf]
  %v166 = vld [vmem:[%s1 + $0x20c] sm:$0xf]
  %v167 = vld [vmem:[%s1 + $0x210] sm:$0xf]
  %v168 = vld [vmem:[%s1 + $0x214] sm:$0xf]
  %v169 = vld [vmem:[%s1 + $0x218] sm:$0xf]
  %v170 = vld [vmem:[%s1 + $0x21c] sm:$0xf]
  %v171 = vld [vmem:[%s1 + $0x220] sm:$0xf]
  %v172 = vld [vmem:[%s1 + $0x224] sm:$0xf]
  %v173 = vld [vmem:[%s1 + $0x228] sm:$0xf]
  %v174 = vld [vmem:[%s1 + $0x22c] sm:$0xf]
  %v175 = vld [vmem:[%s1 + $0x230] sm:$0xf]
  %v176 = vld [vmem:[%s1 + $0x234] sm:$0xf]
  %v177 = vld [vmem:[%s1 + $0x238] sm:$0xf]
  %v178 = vld [vmem:[%s1 + $0x23c] sm:$0xf]
  %v199 = vunpack.c.l.b16 %v15
  %v200 = vunpack.c.h.b16 %v15
  %v201 = vunpack.c.l.b16 %v16
  %v202 = vunpack.c.h.b16 %v16
  %v203 = vunpack.c.l.b16 %v17
  %v204 = vunpack.c.h.b16 %v17
  %v205 = vunpack.c.l.b16 %v18
  %v206 = vunpack.c.h.b16 %v18
  %v207 = vunpack.c.l.b16 %v19
  %v208 = vunpack.c.l.b16 %v20
  %v209 = vunpack.c.h.b16 %v20
  %v210 = vunpack.c.l.b16 %v21
  %v211 = vunpack.c.h.b16 %v21
  %v212 = vunpack.c.l.b16 %v22
  %v213 = vunpack.c.h.b16 %v22
  %v214 = vunpack.c.l.b16 %v23
  %v215 = vunpack.c.h.b16 %v23
  %v216 = vunpack.c.l.b16 %v24
  %v217 = vunpack.c.l.b16 %v25
  %v218 = vunpack.c.h.b16 %v25
  %v219 = vunpack.c.l.b16 %v26
  %v220 = vunpack.c.h.b16 %v26
  %v221 = vunpack.c.l.b16 %v27
  %v222 = vunpack.c.h.b16 %v27
  %v223 = vunpack.c.l.b16 %v28
  %v224 = vunpack.c.h.b16 %v28
  %v225 = vunpack.c.l.b16 %v29
  %v226 = vunpack.c.l.b16 %v30
  %v227 = vunpack.c.h.b16 %v30
  %v228 = vunpack.c.l.b16 %v31
  %v229 = vunpack.c.h.b16 %v31
  %v230 = vunpack.c.l.b16 %v32
  %v231 = vunpack.c.h.b16 %v32
  %v232 = vunpack.c.l.b16 %v33
  %v233 = vunpack.c.h.b16 %v33
  %v234 = vunpack.c.l.b16 %v34
  %v235 = vpack.c.b16 %v208, %v199
  %v236 = vpack.c.b16 %v209, %v200
  %v237 = vpack.c.b16 %v210, %v201
  %v238 = vpack.c.b16 %v211, %v202
  %v239 = vpack.c.b16 %v212, %v203
  %v240 = vpack.c.b16 %v213, %v204
  %v241 = vpack.c.b16 %v214, %v205
  %v242 = vpack.c.b16 %v215, %v206
  %v243 = vpack.c.b16 %v216, %v207
  %v244 = vpack.c.b16 %v226, %v217
  %v245 = vpack.c.b16 %v227, %v218
  %v246 = vpack.c.b16 %v228, %v219
  %v247 = vpack.c.b16 %v229, %v220
  %v248 = vpack.c.b16 %v230, %v221
  %v249 = vpack.c.b16 %v231, %v222
  %v250 = vpack.c.b16 %v232, %v223
  %v251 = vpack.c.b16 %v233, %v224
  %v252 = vpack.c.b16 %v234, %v225
  %v415 = vunpack.c.l.b16 %v35
  %v416 = vunpack.c.l.b16 %v36
  %v417 = vunpack.c.l.b16 %v37
  %v418 = vunpack.c.l.b16 %v38
  %v419 = vunpack.c.l.b16 %v39
  %v420 = vunpack.c.l.b16 %v40
  %v421 = vunpack.c.l.b16 %v41
  %v422 = vunpack.c.l.b16 %v42
  %v423 = vunpack.c.l.b16 %v43
  %v424 = vunpack.c.l.b16 %v44
  %v425 = vunpack.c.l.b16 %v45
  %v426 = vunpack.c.l.b16 %v46
  %v427 = vunpack.c.l.b16 %v47
  %v428 = vunpack.c.l.b16 %v48
  %v429 = vunpack.c.l.b16 %v49
  %v430 = vunpack.c.l.b16 %v50
  %v431 = vunpack.c.l.b16 %v51
  %v432 = vunpack.c.l.b16 %v52
  %v433 = vunpack.c.l.b16 %v53
  %v434 = vunpack.c.l.b16 %v54
  %v435 = vunpack.c.l.b16 %v55
  %v436 = vunpack.c.l.b16 %v56
  %v437 = vunpack.c.l.b16 %v57
  %v438 = vunpack.c.l.b16 %v58
  %v439 = vunpack.c.l.b16 %v59
  %v440 = vunpack.c.l.b16 %v60
  %v441 = vunpack.c.l.b16 %v61
  %v442 = vunpack.c.l.b16 %v62
  %v443 = vunpack.c.l.b16 %v63
  %v444 = vunpack.c.l.b16 %v64
  %v445 = vunpack.c.l.b16 %v65
  %v446 = vunpack.c.l.b16 %v66
  %v447 = vunpack.c.l.b16 %v67
  %v448 = vunpack.c.l.b16 %v68
  %v449 = vunpack.c.l.b16 %v69
  %v450 = vunpack.c.l.b16 %v70
  %v451 = vunpack.c.l.b16 %v71
  %v452 = vunpack.c.l.b16 %v72
  %v453 = vunpack.c.l.b16 %v73
  %v454 = vunpack.c.l.b16 %v74
  %v455 = vunpack.c.l.b16 %v75
  %v456 = vunpack.c.l.b16 %v76
  %v457 = vunpack.c.l.b16 %v77
  %v458 = vunpack.c.l.b16 %v78
  %v459 = vunpack.c.l.b16 %v79
  %v460 = vunpack.c.l.b16 %v80
  %v461 = vunpack.c.l.b16 %v81
  %v462 = vunpack.c.l.b16 %v82
  %v463 = vunpack.c.l.b16 %v83
  %v464 = vunpack.c.l.b16 %v84
  %v465 = vunpack.c.l.b16 %v85
  %v466 = vunpack.c.l.b16 %v86
  %v467 = vunpack.c.l.b16 %v87
  %v468 = vunpack.c.l.b16 %v88
  %v469 = vunpack.c.l.b16 %v89
  %v470 = vunpack.c.l.b16 %v90
  %v471 = vunpack.c.l.b16 %v91
  %v472 = vunpack.c.l.b16 %v92
  %v473 = vunpack.c.l.b16 %v93
  %v474 = vunpack.c.l.b16 %v94
  %v475 = vunpack.c.l.b16 %v95
  %v476 = vunpack.c.l.b16 %v96
  %v477 = vunpack.c.l.b16 %v97
  %v478 = vunpack.c.l.b16 %v98
  %v479 = vunpack.c.l.b16 %v99
  %v480 = vunpack.c.l.b16 %v100
  %v481 = vunpack.c.l.b16 %v101
  %v482 = vunpack.c.l.b16 %v102
  %v483 = vunpack.c.l.b16 %v103
  %v484 = vunpack.c.l.b16 %v104
  %v485 = vunpack.c.l.b16 %v105
  %v486 = vunpack.c.l.b16 %v106
  %v487 = vunpack.c.l.b16 %v107
  %v488 = vunpack.c.l.b16 %v108
  %v489 = vunpack.c.l.b16 %v109
  %v490 = vunpack.c.l.b16 %v110
  %v491 = vunpack.c.l.b16 %v111
  %v492 = vunpack.c.l.b16 %v112
  %v493 = vunpack.c.l.b16 %v113
  %v494 = vunpack.c.l.b16 %v114
  %v495 = vunpack.c.l.b16 %v115
  %v496 = vunpack.c.l.b16 %v116
  %v497 = vunpack.c.l.b16 %v117
  %v498 = vunpack.c.l.b16 %v118
  %v499 = vunpack.c.l.b16 %v119
  %v500 = vunpack.c.l.b16 %v120
  %v501 = vunpack.c.l.b16 %v121
  %v502 = vunpack.c.l.b16 %v122
  %v503 = vunpack.c.l.b16 %v123
  %v504 = vunpack.c.l.b16 %v124
  %v505 = vunpack.c.l.b16 %v125
  %v506 = vunpack.c.l.b16 %v126
  %v507 = vunpack.c.l.b16 %v127
  %v508 = vunpack.c.l.b16 %v128
  %v509 = vunpack.c.l.b16 %v129
  %v510 = vunpack.c.l.b16 %v130
  %v511 = vunpack.c.l.b16 %v131
  %v512 = vunpack.c.l.b16 %v132
  %v513 = vunpack.c.l.b16 %v133
  %v514 = vunpack.c.l.b16 %v134
  %v515 = vunpack.c.l.b16 %v135
  %v516 = vunpack.c.l.b16 %v136
  %v517 = vunpack.c.l.b16 %v137
  %v518 = vunpack.c.l.b16 %v138
  %v519 = vunpack.c.l.b16 %v139
  %v520 = vunpack.c.l.b16 %v140
  %v521 = vunpack.c.l.b16 %v141
  %v522 = vunpack.c.l.b16 %v142
  %v523 = vunpack.c.l.b16 %v143
  %v524 = vunpack.c.l.b16 %v144
  %v525 = vunpack.c.l.b16 %v145
  %v526 = vunpack.c.l.b16 %v146
  %v527 = vunpack.c.l.b16 %v147
  %v528 = vunpack.c.l.b16 %v148
  %v529 = vunpack.c.l.b16 %v149
  %v530 = vunpack.c.l.b16 %v150
  %v531 = vunpack.c.l.b16 %v151
  %v532 = vunpack.c.l.b16 %v152
  %v533 = vunpack.c.l.b16 %v153
  %v534 = vunpack.c.l.b16 %v154
  %v535 = vunpack.c.l.b16 %v155
  %v536 = vunpack.c.l.b16 %v156
  %v537 = vunpack.c.l.b16 %v157
  %v538 = vunpack.c.l.b16 %v158
  %v539 = vunpack.c.l.b16 %v159
  %v540 = vunpack.c.l.b16 %v160
  %v541 = vunpack.c.l.b16 %v161
  %v542 = vunpack.c.l.b16 %v162
  %v543 = vunpack.c.l.b16 %v163
  %v544 = vunpack.c.l.b16 %v164
  %v545 = vunpack.c.l.b16 %v165
  %v546 = vunpack.c.l.b16 %v166
  %v547 = vunpack.c.l.b16 %v167
  %v548 = vunpack.c.l.b16 %v168
  %v549 = vunpack.c.l.b16 %v169
  %v550 = vunpack.c.l.b16 %v170
  %v551 = vunpack.c.l.b16 %v171
  %v552 = vunpack.c.l.b16 %v172
  %v553 = vunpack.c.l.b16 %v173
  %v554 = vunpack.c.l.b16 %v174
  %v555 = vunpack.c.l.b16 %v175
  %v556 = vunpack.c.l.b16 %v176
  %v557 = vunpack.c.l.b16 %v177
  %v558 = vunpack.c.l.b16 %v178
  %v559 = vpack.c.b16 %v416, %v415
  %v560 = vpack.c.b16 %v418, %v417
  %v561 = vpack.c.b16 %v420, %v419
  %v562 = vpack.c.b16 %v422, %v421
  %v563 = vpack.c.b16 %v424, %v423
  %v564 = vpack.c.b16 %v426, %v425
  %v565 = vpack.c.b16 %v428, %v427
  %v566 = vpack.c.b16 %v430, %v429
  %v567 = vpack.c.b16 %v432, %v431
  %v568 = vpack.c.b16 %v434, %v433
  %v569 = vpack.c.b16 %v436, %v435
  %v570 = vpack.c.b16 %v438, %v437
  %v571 = vpack.c.b16 %v440, %v439
  %v572 = vpack.c.b16 %v442, %v441
  %v573 = vpack.c.b16 %v444, %v443
  %v574 = vpack.c.b16 %v446, %v445
  %v575 = vpack.c.b16 %v448, %v447
  %v576 = vpack.c.b16 %v450, %v449
  %v577 = vpack.c.b16 %v452, %v451
  %v578 = vpack.c.b16 %v454, %v453
  %v579 = vpack.c.b16 %v456, %v455
  %v580 = vpack.c.b16 %v458, %v457
  %v581 = vpack.c.b16 %v460, %v459
  %v582 = vpack.c.b16 %v462, %v461
  %v583 = vpack.c.b16 %v464, %v463
  %v584 = vpack.c.b16 %v466, %v465
  %v585 = vpack.c.b16 %v468, %v467
  %v586 = vpack.c.b16 %v470, %v469
  %v587 = vpack.c.b16 %v472, %v471
  %v588 = vpack.c.b16 %v474, %v473
  %v589 = vpack.c.b16 %v476, %v475
  %v590 = vpack.c.b16 %v478, %v477
  %v591 = vpack.c.b16 %v480, %v479
  %v592 = vpack.c.b16 %v482, %v481
  %v593 = vpack.c.b16 %v484, %v483
  %v594 = vpack.c.b16 %v486, %v485
  %v595 = vpack.c.b16 %v488, %v487
  %v596 = vpack.c.b16 %v490, %v489
  %v597 = vpack.c.b16 %v492, %v491
  %v598 = vpack.c.b16 %v494, %v493
  %v599 = vpack.c.b16 %v496, %v495
  %v600 = vpack.c.b16 %v498, %v497
  %v601 = vpack.c.b16 %v500, %v499
  %v602 = vpack.c.b16 %v502, %v501
  %v603 = vpack.c.b16 %v504, %v503
  %v604 = vpack.c.b16 %v506, %v505
  %v605 = vpack.c.b16 %v508, %v507
  %v606 = vpack.c.b16 %v510, %v509
  %v607 = vpack.c.b16 %v512, %v511
  %v608 = vpack.c.b16 %v514, %v513
  %v609 = vpack.c.b16 %v516, %v515
  %v610 = vpack.c.b16 %v518, %v517
  %v611 = vpack.c.b16 %v520, %v519
  %v612 = vpack.c.b16 %v522, %v521
  %v613 = vpack.c.b16 %v524, %v523
  %v614 = vpack.c.b16 %v526, %v525
  %v615 = vpack.c.b16 %v528, %v527
  %v616 = vpack.c.b16 %v530, %v529
  %v617 = vpack.c.b16 %v532, %v531
  %v618 = vpack.c.b16 %v534, %v533
  %v619 = vpack.c.b16 %v536, %v535
  %v620 = vpack.c.b16 %v538, %v537
  %v621 = vpack.c.b16 %v540, %v539
  %v622 = vpack.c.b16 %v542, %v541
  %v623 = vpack.c.b16 %v544, %v543
  %v624 = vpack.c.b16 %v546, %v545
  %v625 = vpack.c.b16 %v548, %v547
  %v626 = vpack.c.b16 %v550, %v549
  %v627 = vpack.c.b16 %v552, %v551
  %v628 = vpack.c.b16 %v554, %v553
  %v629 = vpack.c.b16 %v556, %v555
  %v630 = vpack.c.b16 %v558, %v557
  %703 = vmatprep.subr.bf16.mxu0 0
  %704 = vmatpush1.bf16.msra.mxu0 %v566
  %705 = vmatprep.subr.bf16.mxu0 0
  %706 = vmatpush1.bf16.msra.mxu0 %v565
  %707 = vmatprep.subr.bf16.mxu0 0
  %708 = vmatpush1.bf16.msra.mxu0 %v564
  %709 = vmatprep.subr.bf16.mxu0 0
  %710 = vmatpush1.bf16.msra.mxu0 %v563
  %711 = vmatprep.subr.bf16.mxu0 0
  %712 = vmatpush1.bf16.msra.mxu0 %v562
  %713 = vmatprep.subr.bf16.mxu0 0
  %714 = vmatpush1.bf16.msra.mxu0 %v561
  %715 = vmatprep.subr.bf16.mxu0 0
  %716 = vmatpush1.bf16.msra.mxu0 %v560
  %717 = vmatprep.subr.bf16.mxu0 0
  %718 = vmatpush1.bf16.msra.mxu0 %v559
  %719 = vmatprep.subr.bf16.mxu0 0
  %720 = vmatpush2.bf16.msra.mxu0 %v574
  %721 = vmatprep.subr.bf16.mxu0 0
  %722 = vmatpush2.bf16.msra.mxu0 %v573
  %723 = vmatprep.subr.bf16.mxu0 0
  %724 = vmatpush2.bf16.msra.mxu0 %v572
  %725 = vmatprep.subr.bf16.mxu0 0
  %726 = vmatpush2.bf16.msra.mxu0 %v571
  %727 = vmatprep.subr.bf16.mxu0 0
  %728 = vmatpush2.bf16.msra.mxu0 %v570
  %729 = vmatprep.subr.bf16.mxu0 0
  %730 = vmatpush2.bf16.msra.mxu0 %v569
  %731 = vmatprep.subr.bf16.mxu0 0
  %732 = vmatpush2.bf16.msra.mxu0 %v568
  %733 = vmatprep.subr.bf16.mxu0 0
  %734 = vmatpush2.bf16.msra.mxu0 %v567
  %735 = vmatprep.mubr.bf16.mxu0 %v236
  %736 = vmatmul.mubr.bf16.gmra.mxu0 %v235
  %v737 = vpop.f32.mrf.mxu0
  %v738 = vadd.f32 0.0, %v737
  %v739 = vpop.f32.mrf.mxu0
  %v740 = vpop.f32.mrf.mxu0
  %v741 = vadd.f32 0.0, %v740
  %v742 = vpop.f32.mrf.mxu0
  %743 = vmatprep.mubr.bf16.mxu0 %v245
  %744 = vmatmul.mubr.bf16.gmra.mxu0 %v244
  %v745 = vpop.f32.mrf.mxu0
  %v746 = vadd.f32 0.0, %v745
  %v747 = vpop.f32.mrf.mxu0
  %v748 = vpop.f32.mrf.mxu0
  %v749 = vadd.f32 0.0, %v748
  %v750 = vpop.f32.mrf.mxu0
  %751 = vdwg.mxu0
  %752 = vmatprep.subr.bf16.mxu0 0
  %753 = vmatpush1.bf16.msra.mxu0 %v582
  %754 = vmatprep.subr.bf16.mxu0 0
  %755 = vmatpush1.bf16.msra.mxu0 %v581
  %756 = vmatprep.subr.bf16.mxu0 0
  %757 = vmatpush1.bf16.msra.mxu0 %v580
  %758 = vmatprep.subr.bf16.mxu0 0
  %759 = vmatpush1.bf16.msra.mxu0 %v579
  %760 = vmatprep.subr.bf16.mxu0 0
  %761 = vmatpush1.bf16.msra.mxu0 %v578
  %762 = vmatprep.subr.bf16.mxu0 0
  %763 = vmatpush1.bf16.msra.mxu0 %v577
  %764 = vmatprep.subr.bf16.mxu0 0
  %765 = vmatpush1.bf16.msra.mxu0 %v576
  %766 = vmatprep.subr.bf16.mxu0 0
  %767 = vmatpush1.bf16.msra.mxu0 %v575
  %768 = vmatprep.subr.bf16.mxu0 0
  %769 = vmatpush2.bf16.msra.mxu0 %v590
  %770 = vmatprep.subr.bf16.mxu0 0
  %771 = vmatpush2.bf16.msra.mxu0 %v589
  %772 = vmatprep.subr.bf16.mxu0 0
  %773 = vmatpush2.bf16.msra.mxu0 %v588
  %774 = vmatprep.subr.bf16.mxu0 0
  %775 = vmatpush2.bf16.msra.mxu0 %v587
  %776 = vmatprep.subr.bf16.mxu0 0
  %777 = vmatpush2.bf16.msra.mxu0 %v586
  %778 = vmatprep.subr.bf16.mxu0 0
  %779 = vmatpush2.bf16.msra.mxu0 %v585
  %780 = vmatprep.subr.bf16.mxu0 0
  %781 = vmatpush2.bf16.msra.mxu0 %v584
  %782 = vmatprep.subr.bf16.mxu0 0
  %783 = vmatpush2.bf16.msra.mxu0 %v583
  %784 = vmatprep.mubr.bf16.mxu0 %v238
  %785 = vmatmul.mubr.bf16.gmra.mxu0 %v237
  %v786 = vpop.f32.mrf.mxu0
  %v787 = vadd.f32 %v738, %v786
  %v788 = vpop.f32.mrf.mxu0
  %v789 = vpop.f32.mrf.mxu0
  %v790 = vadd.f32 %v741, %v789
  %v791 = vpop.f32.mrf.mxu0
  %792 = vmatprep.mubr.bf16.mxu0 %v247
  %793 = vmatmul.mubr.bf16.gmra.mxu0 %v246
  %v794 = vpop.f32.mrf.mxu0
  %v795 = vadd.f32 %v746, %v794
  %v796 = vpop.f32.mrf.mxu0
  %v797 = vpop.f32.mrf.mxu0
  %v798 = vadd.f32 %v749, %v797
  %v799 = vpop.f32.mrf.mxu0
  %800 = vdwg.mxu0
  %801 = vmatprep.subr.bf16.mxu0 0
  %802 = vmatpush1.bf16.msra.mxu0 %v598
  %803 = vmatprep.subr.bf16.mxu0 0
  %804 = vmatpush1.bf16.msra.mxu0 %v597
  %805 = vmatprep.subr.bf16.mxu0 0
  %806 = vmatpush1.bf16.msra.mxu0 %v596
  %807 = vmatprep.subr.bf16.mxu0 0
  %808 = vmatpush1.bf16.msra.mxu0 %v595
  %809 = vmatprep.subr.bf16.mxu0 0
  %810 = vmatpush1.bf16.msra.mxu0 %v594
  %811 = vmatprep.subr.bf16.mxu0 0
  %812 = vmatpush1.bf16.msra.mxu0 %v593
  %813 = vmatprep.subr.bf16.mxu0 0
  %814 = vmatpush1.bf16.msra.mxu0 %v592
  %815 = vmatprep.subr.bf16.mxu0 0
  %816 = vmatpush1.bf16.msra.mxu0 %v591
  %817 = vmatprep.subr.bf16.mxu0 0
  %818 = vmatpush2.bf16.msra.mxu0 %v606
  %819 = vmatprep.subr.bf16.mxu0 0
  %820 = vmatpush2.bf16.msra.mxu0 %v605
  %821 = vmatprep.subr.bf16.mxu0 0
  %822 = vmatpush2.bf16.msra.mxu0 %v604
  %823 = vmatprep.subr.bf16.mxu0 0
  %824 = vmatpush2.bf16.msra.mxu0 %v603
  %825 = vmatprep.subr.bf16.mxu0 0
  %826 = vmatpush2.bf16.msra.mxu0 %v602
  %827 = vmatprep.subr.bf16.mxu0 0
  %828 = vmatpush2.bf16.msra.mxu0 %v601
  %829 = vmatprep.subr.bf16.mxu0 0
  %830 = vmatpush2.bf16.msra.mxu0 %v600
  %831 = vmatprep.subr.bf16.mxu0 0
  %832 = vmatpush2.bf16.msra.mxu0 %v599
  %833 = vmatprep.mubr.bf16.mxu0 %v240
  %834 = vmatmul.mubr.bf16.gmra.mxu0 %v239
  %v835 = vpop.f32.mrf.mxu0
  %v836 = vadd.f32 %v787, %v835
  %v837 = vpop.f32.mrf.mxu0
  %v838 = vpop.f32.mrf.mxu0
  %v839 = vadd.f32 %v790, %v838
  %v840 = vpop.f32.mrf.mxu0
  %841 = vmatprep.mubr.bf16.mxu0 %v249
  %842 = vmatmul.mubr.bf16.gmra.mxu0 %v248
  %v843 = vpop.f32.mrf.mxu0
  %v844 = vadd.f32 %v795, %v843
  %v845 = vpop.f32.mrf.mxu0
  %v846 = vpop.f32.mrf.mxu0
  %v847 = vadd.f32 %v798, %v846
  %v848 = vpop.f32.mrf.mxu0
  %849 = vdwg.mxu0
  %850 = vmatprep.subr.bf16.mxu0 0
  %851 = vmatpush1.bf16.msra.mxu0 %v614
  %852 = vmatprep.subr.bf16.mxu0 0
  %853 = vmatpush1.bf16.msra.mxu0 %v613
  %854 = vmatprep.subr.bf16.mxu0 0
  %855 = vmatpush1.bf16.msra.mxu0 %v612
  %856 = vmatprep.subr.bf16.mxu0 0
  %857 = vmatpush1.bf16.msra.mxu0 %v611
  %858 = vmatprep.subr.bf16.mxu0 0
  %859 = vmatpush1.bf16.msra.mxu0 %v610
  %860 = vmatprep.subr.bf16.mxu0 0
  %861 = vmatpush1.bf16.msra.mxu0 %v609
  %862 = vmatprep.subr.bf16.mxu0 0
  %863 = vmatpush1.bf16.msra.mxu0 %v608
  %864 = vmatprep.subr.bf16.mxu0 0
  %865 = vmatpush1.bf16.msra.mxu0 %v607
  %866 = vmatprep.subr.bf16.mxu0 0
  %867 = vmatpush2.bf16.msra.mxu0 %v622
  %868 = vmatprep.subr.bf16.mxu0 0
  %869 = vmatpush2.bf16.msra.mxu0 %v621
  %870 = vmatprep.subr.bf16.mxu0 0
  %871 = vmatpush2.bf16.msra.mxu0 %v620
  %872 = vmatprep.subr.bf16.mxu0 0
  %873 = vmatpush2.bf16.msra.mxu0 %v619
  %874 = vmatprep.subr.bf16.mxu0 0
  %875 = vmatpush2.bf16.msra.mxu0 %v618
  %876 = vmatprep.subr.bf16.mxu0 0
  %877 = vmatpush2.bf16.msra.mxu0 %v617
  %878 = vmatprep.subr.bf16.mxu0 0
  %879 = vmatpush2.bf16.msra.mxu0 %v616
  %880 = vmatprep.subr.bf16.mxu0 0
  %881 = vmatpush2.bf16.msra.mxu0 %v615
  %882 = vmatprep.mubr.bf16.mxu0 %v242
  %883 = vmatmul.mubr.bf16.gmra.mxu0 %v241
  %v884 = vpop.f32.mrf.mxu0
  %v885 = vadd.f32 %v836, %v884
  %v886 = vpop.f32.mrf.mxu0
  %v887 = vpop.f32.mrf.mxu0
  %v888 = vadd.f32 %v839, %v887
  %v889 = vpop.f32.mrf.mxu0
  %890 = vmatprep.mubr.bf16.mxu0 %v251
  %891 = vmatmul.mubr.bf16.gmra.mxu0 %v250
  %v892 = vpop.f32.mrf.mxu0
  %v893 = vadd.f32 %v844, %v892
  %v894 = vpop.f32.mrf.mxu0
  %v895 = vpop.f32.mrf.mxu0
  %v896 = vadd.f32 %v847, %v895
  %v897 = vpop.f32.mrf.mxu0
  %898 = vdwg.mxu0
  %899 = vmatprep.subr.bf16.mxu0 0
  %900 = vmatpush1.bf16.msra.mxu0 %v630
  %901 = vmatprep.subr.bf16.mxu0 0
  %902 = vmatpush1.bf16.msra.mxu0 %v629
  %903 = vmatprep.subr.bf16.mxu0 0
  %904 = vmatpush1.bf16.msra.mxu0 %v628
  %905 = vmatprep.subr.bf16.mxu0 0
  %906 = vmatpush1.bf16.msra.mxu0 %v627
  %907 = vmatprep.subr.bf16.mxu0 0
  %908 = vmatpush1.bf16.msra.mxu0 %v626
  %909 = vmatprep.subr.bf16.mxu0 0
  %910 = vmatpush1.bf16.msra.mxu0 %v625
  %911 = vmatprep.subr.bf16.mxu0 0
  %912 = vmatpush1.bf16.msra.mxu0 %v624
  %913 = vmatprep.subr.bf16.mxu0 0
  %914 = vmatpush1.bf16.msra.mxu0 %v623
  %915 = vmatprep.subr.bf16.mxu0 0
  %916 = vmatpush2.bf16.msra.mxu0 0
  %917 = vmatprep.subr.bf16.mxu0 0
  %918 = vmatpush2.bf16.msra.mxu0 0
  %919 = vmatprep.subr.bf16.mxu0 0
  %920 = vmatpush2.bf16.msra.mxu0 0
  %921 = vmatprep.subr.bf16.mxu0 0
  %922 = vmatpush2.bf16.msra.mxu0 0
  %923 = vmatprep.subr.bf16.mxu0 0
  %924 = vmatpush2.bf16.msra.mxu0 0
  %925 = vmatprep.subr.bf16.mxu0 0
  %926 = vmatpush2.bf16.msra.mxu0 0
  %927 = vmatprep.subr.bf16.mxu0 0
  %928 = vmatpush2.bf16.msra.mxu0 0
  %929 = vmatprep.subr.bf16.mxu0 0
  %930 = vmatpush2.bf16.msra.mxu0 0
  %931 = vmatprep.mubr.bf16.mxu0 0
  %932 = vmatmul.mubr.bf16.gmra.mxu0 %v243
  %v933 = vpop.f32.mrf.mxu0
  %v934 = vadd.f32 %v885, %v933
  %v935 = vpop.f32.mrf.mxu0
  %v936 = vpop.f32.mrf.mxu0
  %v937 = vadd.f32 %v888, %v936
  %v938 = vpop.f32.mrf.mxu0
  %939 = vmatprep.mubr.bf16.mxu0 0
  %940 = vmatmul.mubr.bf16.gmra.mxu0 %v252
  %v941 = vpop.f32.mrf.mxu0
  %v942 = vadd.f32 %v893, %v941
  %v943 = vpop.f32.mrf.mxu0
  %v944 = vpop.f32.mrf.mxu0
  %v945 = vadd.f32 %v896, %v944
  %v946 = vpop.f32.mrf.mxu0
  %947 = vdwg.mxu0
  %v948 = vpack.c.bf16 %v937, %v934
  %v949 = vpack.c.bf16 %v945, %v942
  %v952 = vunpack.c.l.b16 %v948
  %v953 = vunpack.c.h.b16 %v948
  %v954 = vunpack.c.l.b16 %v949
  %v955 = vunpack.c.h.b16 %v949
  %v956 = vpack.c.b16 %v952, %v952
  %v957 = vpack.c.b16 %v953, %v953
  %v958 = vpack.c.b16 %v954, %v954
  %v959 = vpack.c.b16 %v955, %v955
  %964 = vst [vmem:[%s2] sm:$0xf] %v956
  %965 = vst [vmem:[%s2 + $0x4] sm:$0xf] %v957
  %966 = vst [vmem:[%s2 + $0x8] sm:$0xf] %v958
  %967 = vst [vmem:[%s2 + $0xc] sm:$0xf] %v959
  %v968 = vadd.f32 %v934, %v937
  %v969 = vadd.f32 %v968, %v942
  %v970 = vadd.f32 %v969, %v945
  %v971 = vrot.slane %v970, 4
  %v972 = vadd.f32 %v970, %v971
  %v973 = vrot.slane %v972, 2
  %v974 = vadd.f32 %v972, %v973
  %v975 = vrot.slane %v974, 1
  %v976 = vadd.f32 %v974, %v975
  %v977 = vmul.f32 %v934, %v934
  %v978 = vmul.f32 %v937, %v937
  %v979 = vmul.f32 %v942, %v942
  %v980 = vmul.f32 %v945, %v945
  %v981 = vadd.f32 %v977, %v978
  %v982 = vadd.f32 %v981, %v979
  %v983 = vadd.f32 %v982, %v980
  %v984 = vrot.slane %v983, 4
  %v985 = vadd.f32 %v983, %v984
  %v986 = vrot.slane %v985, 2
  %v987 = vadd.f32 %v985, %v986
  %v988 = vrot.slane %v987, 1
  %v989 = vadd.f32 %v987, %v988
  %990 = vst [vmem:[%s3] sm:$0xff] %v976
  %991 = vst [vmem:[%s4] sm:$0xff] %v989
  // Predicated region
  $region10: #{multi_scale_patch_embedding.5} parent=0 // pred_check
    _
  $region11: #{multi_scale_patch_embedding.5} parent=0 // pred_check_branch
    %993 = sbr.rel (0) target = $region13
  $region12: #{multi_scale_patch_embedding.5} parent=0 // pred_region
    _
  $region13: #{multi_scale_patch_embedding.5} parent=0 // pred_fallthru
    _
  // Predicated region
  $region14: #{multi_scale_patch_embedding.5} parent=0 // pred_check
    _
  $region15: #{multi_scale_patch_embedding.5} parent=0 // pred_check_branch
    %995 = sbr.rel (0) target = $region17
  $region16: #{multi_scale_patch_embedding.5} parent=0 // pred_region
    _
  $region17: #{multi_scale_patch_embedding.5} parent=0 // pred_fallthru
    _
  // Predicated region
  $region18: #{multi_scale_patch_embedding.5} parent=0 // pred_check
    _
  $region19: #{multi_scale_patch_embedding.5} parent=0 // pred_check_branch
    %997 = sbr.rel (0) target = $region21
  $region20: #{multi_scale_patch_embedding.5} parent=0 // pred_region
    _
  $region21: #{multi_scale_patch_embedding.5} parent=0 // pred_fallthru
    _
  // Predicated region
  $region22: #{multi_scale_patch_embedding.5} parent=0 // pred_check
    _
  $region23: #{multi_scale_patch_embedding.5} parent=0 // pred_check_branch
    %999 = sbr.rel (0) target = $region25
  $region24: #{multi_scale_patch_embedding.5} parent=0 // pred_region
    _
  $region25: #{multi_scale_patch_embedding.5} parent=0 // pred_fallthru
    _
  // Predicated region
  $region26: #{multi_scale_patch_embedding.5} parent=0 // pred_check
    _
  $region27: #{multi_scale_patch_embedding.5} parent=0 // pred_check_branch
    %1001 = sbr.rel (0) target = $region29
  $region28: #{multi_scale_patch_embedding.5} parent=0 // pred_region
    _
  $region29: #{multi_scale_patch_embedding.5} parent=0 // pred_fallthru
    _
  // Predicated region
  $region30: #{multi_scale_patch_embedding.5} parent=0 // pred_check
    _
  $region31: #{multi_scale_patch_embedding.5} parent=0 // pred_check_branch
    %1003 = sbr.rel (0) target = $region33
  $region32: #{multi_scale_patch_embedding.5} parent=0 // pred_region
    _
  $region33: #{multi_scale_patch_embedding.5} parent=0 // pred_fallthru
    _

// kernel: multi_scale_patch_embedding.7
$region0: #{multi_scale_patch_embedding.7}
  #allocation0 [shape = 'u32[]', space=smem, size = 0x4, offset = 0x4, fixed_abs, tag = 'smem constant byte address 0x4 - core index']
  #allocation1 [shape = 'u32[144,128]{1,0:T(1,128)}', space=vmem, size = 0x12000, scoped, tag = 'internal scratch']
  %s0 = inlined_call_operand.vmem [shape: bf16[8,256], index: 0, kind: input, shape index: {}]
  %s1 = inlined_call_operand.vmem [shape: f32[1,256], index: 1, kind: input, shape index: {}]
  %s2 = inlined_call_operand.vmem [shape: f32[1,256], index: 2, kind: input, shape index: {}]
  %s3 = inlined_call_operand.vmem [shape: bf16[256,64], index: 3, kind: input, shape index: {}]
  %s4 = inlined_call_operand.vmem [shape: f32[1,64], index: 4, kind: input, shape index: {}]
  %s5 = inlined_call_operand.vmem [shape: bf16[8,64], index: 5, kind: output, shape index: {}]
  %s6 = sld [smem:[#allocation0]]
  $region30: #{multi_scale_patch_embedding.7} parent=0
    _
  %s8 = ssub.s32 1, %s6
  %s9 = scalar_select 0, %s8, %s6
  // Predicated region
  $region2: #{multi_scale_patch_embedding.7} parent=0 // pred_check
    _
  $region3: #{multi_scale_patch_embedding.7} parent=0 // pred_check_branch
    %11 = sbr.rel (0) target = $region5
  $region4: #{multi_scale_patch_embedding.7} parent=0 // pred_region
    _
  $region5: #{multi_scale_patch_embedding.7} parent=0 // pred_fallthru
    _
  // Predicated region
  $region6: #{multi_scale_patch_embedding.7} parent=0 // pred_check
    _
  $region7: #{multi_scale_patch_embedding.7} parent=0 // pred_check_branch
    %13 = sbr.rel (0) target = $region9
  $region8: #{multi_scale_patch_embedding.7} parent=0 // pred_region
    _
  $region9: #{multi_scale_patch_embedding.7} parent=0 // pred_fallthru
    _
  // Predicated region
  $region10: #{multi_scale_patch_embedding.7} parent=0 // pred_check
    _
  $region11: #{multi_scale_patch_embedding.7} parent=0 // pred_check_branch
    %15 = sbr.rel (0) target = $region13
  $region12: #{multi_scale_patch_embedding.7} parent=0 // pred_region
    _
  $region13: #{multi_scale_patch_embedding.7} parent=0 // pred_fallthru
    _
  // Predicated region
  $region14: #{multi_scale_patch_embedding.7} parent=0 // pred_check
    _
  $region15: #{multi_scale_patch_embedding.7} parent=0 // pred_check_branch
    %17 = sbr.rel (0) target = $region17
  $region16: #{multi_scale_patch_embedding.7} parent=0 // pred_region
    _
  $region17: #{multi_scale_patch_embedding.7} parent=0 // pred_fallthru
    _
  // Predicated region
  $region18: #{multi_scale_patch_embedding.7} parent=0 // pred_check
    _
  $region19: #{multi_scale_patch_embedding.7} parent=0 // pred_check_branch
    %19 = sbr.rel (0) target = $region21
  $region20: #{multi_scale_patch_embedding.7} parent=0 // pred_region
    _
  $region21: #{multi_scale_patch_embedding.7} parent=0 // pred_fallthru
    _
  %v21 = vld [vmem:[%s0] sm:$0xff]
  %v22 = vunpack.c.l.bf16 %v21
  %v23 = vunpack.c.h.bf16 %v21
  %v24 = vld [vmem:[%s1] sm:$0x3]
  %v26 = vlaneseq
  %v27 = vshrl.u32 %v26, 7
  %v28 = vsub.s32 0, %v27
  %v29 = vrot.slane %v24, %v28
  %v30 = vlaneseq
  %v31 = vshrl.u32 %v30, 7
  %v32 = vsub.s32 1, %v31
  %v33 = vrot.slane %v24, %v32
  %v36 = vmul.f32 %v22, %v29
  %v37 = vmul.f32 %v23, %v33
  %v38 = vld [vmem:[%s2] sm:$0x3]
  %v40 = vlaneseq
  %v41 = vshrl.u32 %v40, 7
  %v42 = vsub.s32 0, %v41
  %v43 = vrot.slane %v38, %v42
  %v44 = vlaneseq
  %v45 = vshrl.u32 %v44, 7
  %v46 = vsub.s32 1, %v45
  %v47 = vrot.slane %v38, %v46
  %v50 = vadd.f32 %v36, %v43
  %v51 = vadd.f32 %v37, %v47
  %v52 = vmax.f32 %v50, 0.0
  %v53 = vmax.f32 %v51, 0.0
  %v54 = vpack.c.bf16 %v52, %v52
  %v55 = vpack.c.bf16 %v53, %v53
  %v56 = vld [vmem:[%s3] sm:$0xf]
  %v57 = vld [vmem:[%s3 + $0x4] sm:$0xf]
  %v58 = vld [vmem:[%s3 + $0x8] sm:$0xf]
  %v59 = vld [vmem:[%s3 + $0xc] sm:$0xf]
  %v60 = vld [vmem:[%s3 + $0x10] sm:$0xf]
  %v61 = vld [vmem:[%s3 + $0x14] sm:$0xf]
  %v62 = vld [vmem:[%s3 + $0x18] sm:$0xf]
  %v63 = vld [vmem:[%s3 + $0x1c] sm:$0xf]
  %v64 = vld [vmem:[%s3 + $0x20] sm:$0xf]
  %v65 = vld [vmem:[%s3 + $0x24] sm:$0xf]
  %v66 = vld [vmem:[%s3 + $0x28] sm:$0xf]
  %v67 = vld [vmem:[%s3 + $0x2c] sm:$0xf]
  %v68 = vld [vmem:[%s3 + $0x30] sm:$0xf]
  %v69 = vld [vmem:[%s3 + $0x34] sm:$0xf]
  %v70 = vld [vmem:[%s3 + $0x38] sm:$0xf]
  %v71 = vld [vmem:[%s3 + $0x3c] sm:$0xf]
  %v72 = vld [vmem:[%s3 + $0x40] sm:$0xf]
  %v73 = vld [vmem:[%s3 + $0x44] sm:$0xf]
  %v74 = vld [vmem:[%s3 + $0x48] sm:$0xf]
  %v75 = vld [vmem:[%s3 + $0x4c] sm:$0xf]
  %v76 = vld [vmem:[%s3 + $0x50] sm:$0xf]
  %v77 = vld [vmem:[%s3 + $0x54] sm:$0xf]
  %v78 = vld [vmem:[%s3 + $0x58] sm:$0xf]
  %v79 = vld [vmem:[%s3 + $0x5c] sm:$0xf]
  %v80 = vld [vmem:[%s3 + $0x60] sm:$0xf]
  %v81 = vld [vmem:[%s3 + $0x64] sm:$0xf]
  %v82 = vld [vmem:[%s3 + $0x68] sm:$0xf]
  %v83 = vld [vmem:[%s3 + $0x6c] sm:$0xf]
  %v84 = vld [vmem:[%s3 + $0x70] sm:$0xf]
  %v85 = vld [vmem:[%s3 + $0x74] sm:$0xf]
  %v86 = vld [vmem:[%s3 + $0x78] sm:$0xf]
  %v87 = vld [vmem:[%s3 + $0x7c] sm:$0xf]
  %v88 = vld [vmem:[%s4] sm:$0x1]
  %v90 = vlaneseq
  %v91 = vshrl.u32 %v90, 7
  %v92 = vsub.s32 0, %v91
  %v93 = vrot.slane %v88, %v92
  %v127 = vunpack.c.l.b16 %v56
  %v128 = vunpack.c.l.b16 %v57
  %v129 = vunpack.c.l.b16 %v58
  %v130 = vunpack.c.l.b16 %v59
  %v131 = vunpack.c.l.b16 %v60
  %v132 = vunpack.c.l.b16 %v61
  %v133 = vunpack.c.l.b16 %v62
  %v134 = vunpack.c.l.b16 %v63
  %v135 = vunpack.c.l.b16 %v64
  %v136 = vunpack.c.l.b16 %v65
  %v137 = vunpack.c.l.b16 %v66
  %v138 = vunpack.c.l.b16 %v67
  %v139 = vunpack.c.l.b16 %v68
  %v140 = vunpack.c.l.b16 %v69
  %v141 = vunpack.c.l.b16 %v70
  %v142 = vunpack.c.l.b16 %v71
  %v143 = vunpack.c.l.b16 %v72
  %v144 = vunpack.c.l.b16 %v73
  %v145 = vunpack.c.l.b16 %v74
  %v146 = vunpack.c.l.b16 %v75
  %v147 = vunpack.c.l.b16 %v76
  %v148 = vunpack.c.l.b16 %v77
  %v149 = vunpack.c.l.b16 %v78
  %v150 = vunpack.c.l.b16 %v79
  %v151 = vunpack.c.l.b16 %v80
  %v152 = vunpack.c.l.b16 %v81
  %v153 = vunpack.c.l.b16 %v82
  %v154 = vunpack.c.l.b16 %v83
  %v155 = vunpack.c.l.b16 %v84
  %v156 = vunpack.c.l.b16 %v85
  %v157 = vunpack.c.l.b16 %v86
  %v158 = vunpack.c.l.b16 %v87
  %v159 = vpack.c.b16 %v128, %v127
  %v160 = vpack.c.b16 %v130, %v129
  %v161 = vpack.c.b16 %v132, %v131
  %v162 = vpack.c.b16 %v134, %v133
  %v163 = vpack.c.b16 %v136, %v135
  %v164 = vpack.c.b16 %v138, %v137
  %v165 = vpack.c.b16 %v140, %v139
  %v166 = vpack.c.b16 %v142, %v141
  %v167 = vpack.c.b16 %v144, %v143
  %v168 = vpack.c.b16 %v146, %v145
  %v169 = vpack.c.b16 %v148, %v147
  %v170 = vpack.c.b16 %v150, %v149
  %v171 = vpack.c.b16 %v152, %v151
  %v172 = vpack.c.b16 %v154, %v153
  %v173 = vpack.c.b16 %v156, %v155
  %v174 = vpack.c.b16 %v158, %v157
  %191 = vmatprep.subr.bf16.mxu0 0
  %192 = vmatpush1.bf16.msra.mxu0 %v166
  %193 = vmatprep.subr.bf16.mxu0 0
  %194 = vmatpush1.bf16.msra.mxu0 %v165
  %195 = vmatprep.subr.bf16.mxu0 0
  %196 = vmatpush1.bf16.msra.mxu0 %v164
  %197 = vmatprep.subr.bf16.mxu0 0
  %198 = vmatpush1.bf16.msra.mxu0 %v163
  %199 = vmatprep.subr.bf16.mxu0 0
  %200 = vmatpush1.bf16.msra.mxu0 %v162
  %201 = vmatprep.subr.bf16.mxu0 0
  %202 = vmatpush1.bf16.msra.mxu0 %v161
  %203 = vmatprep.subr.bf16.mxu0 0
  %204 = vmatpush1.bf16.msra.mxu0 %v160
  %205 = vmatprep.subr.bf16.mxu0 0
  %206 = vmatpush1.bf16.msra.mxu0 %v159
  %207 = vmatprep.subr.bf16.mxu0 0
  %208 = vmatpush2.bf16.msra.mxu0 %v174
  %209 = vmatprep.subr.bf16.mxu0 0
  %210 = vmatpush2.bf16.msra.mxu0 %v173
  %211 = vmatprep.subr.bf16.mxu0 0
  %212 = vmatpush2.bf16.msra.mxu0 %v172
  %213 = vmatprep.subr.bf16.mxu0 0
  %214 = vmatpush2.bf16.msra.mxu0 %v171
  %215 = vmatprep.subr.bf16.mxu0 0
  %216 = vmatpush2.bf16.msra.mxu0 %v170
  %217 = vmatprep.subr.bf16.mxu0 0
  %218 = vmatpush2.bf16.msra.mxu0 %v169
  %219 = vmatprep.subr.bf16.mxu0 0
  %220 = vmatpush2.bf16.msra.mxu0 %v168
  %221 = vmatprep.subr.bf16.mxu0 0
  %222 = vmatpush2.bf16.msra.mxu0 %v167
  %223 = vmatprep.mubr.bf16.mxu0 %v55
  %224 = vmatmul.mubr.bf16.gmra.mxu0 %v54
  %v225 = vpop.f32.mrf.mxu0
  %v226 = vadd.f32 %v93, %v225
  %v227 = vpop.f32.mrf.mxu0
  %v228 = vpop.f32.mrf.mxu0
  %v229 = vpop.f32.mrf.mxu0
  %230 = vdwg.mxu0
  %v231 = vpack.c.bf16 %v226, %v226
  %vm232 = vcmask 519168
  %233 = vst.msk [vmem:[%s5] sm:$0xf] %vm232, %v231
  // Predicated region
  $region22: #{multi_scale_patch_embedding.7} parent=0 // pred_check
    _
  $region23: #{multi_scale_patch_embedding.7} parent=0 // pred_check_branch
    %235 = sbr.rel (0) target = $region25
  $region24: #{multi_scale_patch_embedding.7} parent=0 // pred_region
    _
  $region25: #{multi_scale_patch_embedding.7} parent=0 // pred_fallthru
    _
  // Predicated region
  $region26: #{multi_scale_patch_embedding.7} parent=0 // pred_check
    _
  $region27: #{multi_scale_patch_embedding.7} parent=0 // pred_check_branch
    %237 = sbr.rel (0) target = $region29
  $region28: #{multi_scale_patch_embedding.7} parent=0 // pred_region
    _
  $region29: #{multi_scale_patch_embedding.7} parent=0 // pred_fallthru
    _

</llo_original>
